<compile_context>
chip_gen: v7x
topology: tpu7x:2x2x1
jax: 0.10.0
libtpu: 0.0.40
codegen_flags: <defaults>
</compile_context>

<pallas_src>
import math
import jax
import jax.numpy as jnp
import numpy as np
from jax import lax
from jax.experimental import pallas as pl
from jax.experimental.pallas import tpu as pltpu

# ---------------- model config (small, consistent with the module) ----------------
B = 2          # batch
S = 8          # sequence length
D = 32         # Dim_Model (Features)
H = 4          # Num_Heads
D_K = D // H   # per-head dim
D_FF = 64      # Dim_FeedForward
EPS = 1e-6
NEG_INF = -1e9

BS = B * S     # 16 rows processed in one kernel invocation
HS = H * S     # 32 (all-heads score width)


def encoder_block_kernel(x_ref, mask_ref, bd_ref, bsum_ref,
                         ln1_a_ref, ln1_b_ref, wq_ref, wk_ref, wv_ref, wo_ref,
                         ln2_a_ref, ln2_b_ref, w1_ref, b1_ref, w2_ref, b2_ref,
                         out_ref):
    x = x_ref[...]                      # (BS, D) f32 — whole batch, flattened
    bd_keep = bd_ref[...]               # (HS, D)  block-diag 0/1 mask (row r//S keeps cols of head d//D_K)
    blocksum = bsum_ref[...]            # (HS, HS) 0/1 per-head-block summation matrix

    # hoist params (read once)
    ln1_a = ln1_a_ref[...]
    ln1_b = ln1_b_ref[...]
    ln2_a = ln2_a_ref[...]
    ln2_b = ln2_b_ref[...]
    b1 = b1_ref[...]
    b2 = b2_ref[...]

    def layer_norm(v, alpha, bias):
        # matches torch custom LN: mean, unbiased std, divide by (std + eps)
        mean = jnp.mean(v, axis=-1, keepdims=True)
        var = jnp.sum((v - mean) ** 2, axis=-1, keepdims=True) / (v.shape[-1] - 1)
        inv = pl.reciprocal(jnp.sqrt(var) + EPS, approx=True)      # EUP
        return alpha * (v - mean) * inv + bias

    # ---- residual connection 0: self-attention on LN1(x) ----
    y = layer_norm(x, ln1_a, ln1_b)                                 # (BS, D)

    # Q/K/V projections (three tiny MXU pushes; keeps everything lane-aligned).
    # 1/sqrt(D_k) folded into Q once.
    q = jnp.dot(y, wq_ref[...], preferred_element_type=jnp.float32) * (1.0 / math.sqrt(D_K))
    k = jnp.dot(y, wk_ref[...], preferred_element_type=jnp.float32)
    v = jnp.dot(y, wv_ref[...], preferred_element_type=jnp.float32)

    attn_parts = []
    for b in range(B):                                              # static unroll over batch (B=2)
        lo = b * S                                                  # sublane-aligned (multiple of 8)
        qb = q[lo:lo + S, :]                                        # (S, D)
        kb = k[lo:lo + S, :]
        vb = v[lo:lo + S, :]
        mb = mask_ref[b]                                            # (S, HS) int32 (mask tiled over heads)

        # block-diagonal per-head K / V: row h*S+j keeps only head-h feature columns
        k_bd = jnp.concatenate([kb] * H, axis=0) * bd_keep          # (HS, D)
        v_bd = jnp.concatenate([vb] * H, axis=0) * bd_keep          # (HS, D)

        # all-heads scores in one MXU push: contract feature dims -> (S, HS)
        scores = lax.dot_general(qb, k_bd, (((1,), (1,)), ((), ())),
                                 preferred_element_type=jnp.float32)
        scores = jnp.where(mb == 0, NEG_INF, scores)                # masked_fill_
        # per-row max over all heads (softmax is shift-invariant within each head block)
        scores = scores - jnp.max(scores, axis=-1, keepdims=True)
        e = jnp.exp(scores)
        # per-head denominators, broadcast back to every column of the head, via one matmul
        denom = jnp.dot(e, blocksum, preferred_element_type=jnp.float32)
        p = e * pl.reciprocal(denom, approx=True)                   # EUP
        # PV for all heads at once; output lands already head-concatenated: (S, D)
        attn_parts.append(jnp.dot(p, v_bd, preferred_element_type=jnp.float32))

    attn = jnp.concatenate(attn_parts, axis=0)                      # (BS, D), sublane-aligned concat
    attn = jnp.dot(attn, wo_ref[...], preferred_element_type=jnp.float32)
    x1 = x + attn

    # ---- residual connection 1: feed-forward on LN2(x1) ----
    y2 = layer_norm(x1, ln2_a, ln2_b)
    h1 = jnp.maximum(jnp.dot(y2, w1_ref[...], preferred_element_type=jnp.float32) + b1, 0.0)
    ffn = jnp.dot(h1, w2_ref[...], preferred_element_type=jnp.float32) + b2
    out_ref[...] = x1 + ffn                                          # (BS, D)


def encoder_block(x, mask, params):
    (ln1_a, ln1_b, wq, wk, wv, wo, ln2_a, ln2_b, w1, b1, w2, b2) = params

    # one-time wrapper-side prep (hoisted out of the kernel)
    x_flat = x.reshape(BS, D)
    mask_t = jnp.tile(mask, (1, 1, H)).astype(jnp.int32)            # (B, S, HS)

    r = np.arange(HS)
    bd_keep = (r[:, None] // S == (np.arange(D)[None, :] // D_K)).astype(np.float32)   # (HS, D)
    blocksum = (r[:, None] // S == (r[None, :] // S)).astype(np.float32)               # (HS, HS)
    bd_keep = jnp.asarray(bd_keep)
    blocksum = jnp.asarray(blocksum)

    inputs = (x_flat, mask_t, bd_keep, blocksum,
              ln1_a, ln1_b, wq, wk, wv, wo, ln2_a, ln2_b, w1, b1, w2, b2)

    def full_spec(a):
        rank = a.ndim
        return pl.BlockSpec(a.shape, lambda i, _r=rank: (0,) * _r)

    in_specs = [full_spec(a) for a in inputs]
    out_specs = pl.BlockSpec((BS, D), lambda i: (0, 0))

    out = pl.pallas_call(
        encoder_block_kernel,
        out_shape=jax.ShapeDtypeStruct((BS, D), jnp.float32),
        grid_spec=pltpu.PrefetchScalarGridSpec(
            num_scalar_prefetch=0,
            grid=(1,),                       # single invocation: whole batch in one step
            in_specs=in_specs,
            out_specs=out_specs,
        ),
        compiler_params=pltpu.CompilerParams(dimension_semantics=("arbitrary",)),
    )(*inputs)

    return out.reshape(B, S, D)


# ---------------- pure-JAX reference for validation ----------------
def reference(x, mask, params):
    (ln1_a, ln1_b, wq, wk, wv, wo, ln2_a, ln2_b, w1, b1, w2, b2) = params

    def ln(v, a, c):
        mean = jnp.mean(v, axis=-1, keepdims=True)
        var = jnp.sum((v - mean) ** 2, axis=-1, keepdims=True) / (v.shape[-1] - 1)
        return a * (v - mean) / (jnp.sqrt(var) + EPS) + c

    y = ln(x, ln1_a, ln1_b)
    q = y @ wq
    k = y @ wk
    v = y @ wv

    def split(t):  # (B,S,D) -> (B,H,S,Dk)
        return t.reshape(B, S, H, D_K).transpose(0, 2, 1, 3)

    qh, kh, vh = split(q), split(k), split(v)
    scores = jnp.einsum("bhqd,bhkd->bhqk", qh, kh) / math.sqrt(D_K)
    scores = jnp.where(mask[:, None, :, :] == 0, NEG_INF, scores)
    p = jax.nn.softmax(scores, axis=-1)
    o = jnp.einsum("bhqk,bhkd->bhqd", p, vh).transpose(0, 2, 1, 3).reshape(B, S, D)
    x1 = x + o @ wo
    y2 = ln(x1, ln2_a, ln2_b)
    ffn = jnp.maximum(y2 @ w1 + b1, 0.0) @ w2 + b2
    return x1 + ffn


if __name__ == "__main__":
    key = jax.random.PRNGKey(0)
    ks = jax.random.split(key, 10)

    x = jax.random.normal(ks[0], (B, S, D), dtype=jnp.float32)

    # padding mask: batch 0 attends everywhere, batch 1 has last 2 positions padded
    lens = jnp.array([S, S - 2])
    pos = jnp.arange(S)
    key_valid = (pos[None, :] < lens[:, None]).astype(jnp.int32)     # (B, S)
    mask = jnp.broadcast_to(key_valid[:, None, :], (B, S, S)).astype(jnp.int32)

    scale = 0.1
    params = (
        jnp.ones((1, D), jnp.float32),                                  # ln1 alpha
        jnp.zeros((1, D), jnp.float32),                                 # ln1 bias
        scale * jax.random.normal(ks[1], (D, D), jnp.float32),          # Wq
        scale * jax.random.normal(ks[2], (D, D), jnp.float32),          # Wk
        scale * jax.random.normal(ks[3], (D, D), jnp.float32),          # Wv
        scale * jax.random.normal(ks[4], (D, D), jnp.float32),          # Wo
        jnp.ones((1, D), jnp.float32),                                  # ln2 alpha
        jnp.zeros((1, D), jnp.float32),                                 # ln2 bias
        scale * jax.random.normal(ks[5], (D, D_FF), jnp.float32),       # W1
        scale * jax.random.normal(ks[6], (1, D_FF), jnp.float32),       # b1
        scale * jax.random.normal(ks[7], (D_FF, D), jnp.float32),       # W2
        scale * jax.random.normal(ks[8], (1, D), jnp.float32),          # b2
    )

    out = encoder_block(x, mask, params)
    out = jax.block_until_ready(out)

    ref = jax.block_until_ready(reference(x, mask, params))
    # tolerance loosened slightly: approx (EUP) reciprocals carry ~2^-12 relative error
    np.testing.assert_allclose(np.asarray(out), np.asarray(ref), rtol=5e-3, atol=5e-3)

    print("KERNEL_OK")
</pallas_src>

<mosaic_0001>
module attributes {stable_mosaic.version = 11 : i64} {
  func.func @encoder_block_kernel(%arg0: i32, %arg1: memref<16x32xf32, #tpu.memory_space<vmem>>, %arg2: memref<2x8x32xi32, #tpu.memory_space<vmem>>, %arg3: memref<32x32xf32, #tpu.memory_space<vmem>>, %arg4: memref<32x32xf32, #tpu.memory_space<vmem>>, %arg5: memref<1x32xf32, #tpu.memory_space<vmem>>, %arg6: memref<1x32xf32, #tpu.memory_space<vmem>>, %arg7: memref<32x32xf32, #tpu.memory_space<vmem>>, %arg8: memref<32x32xf32, #tpu.memory_space<vmem>>, %arg9: memref<32x32xf32, #tpu.memory_space<vmem>>, %arg10: memref<32x32xf32, #tpu.memory_space<vmem>>, %arg11: memref<1x32xf32, #tpu.memory_space<vmem>>, %arg12: memref<1x32xf32, #tpu.memory_space<vmem>>, %arg13: memref<32x64xf32, #tpu.memory_space<vmem>>, %arg14: memref<1x64xf32, #tpu.memory_space<vmem>>, %arg15: memref<64x32xf32, #tpu.memory_space<vmem>>, %arg16: memref<1x32xf32, #tpu.memory_space<vmem>>, %arg17: memref<16x32xf32, #tpu.memory_space<vmem>>) attributes {dimension_semantics = [#tpu.dimension_semantics<arbitrary>], iteration_bounds = array<i64: 1>, scalar_prefetch = 0 : i64, scratch_operands = 0 : i64, tpu.core_type = #tpu.core_type<tc>, window_params = [{pipeline_mode = #tpu.pipeline_mode<synchronous>, transform_indices = @transform_0, window_bounds = array<i64: 16, 32>}, {pipeline_mode = #tpu.pipeline_mode<synchronous>, transform_indices = @transform_1, window_bounds = array<i64: 2, 8, 32>}, {pipeline_mode = #tpu.pipeline_mode<synchronous>, transform_indices = @transform_2, window_bounds = array<i64: 32, 32>}, {pipeline_mode = #tpu.pipeline_mode<synchronous>, transform_indices = @transform_3, window_bounds = array<i64: 32, 32>}, {pipeline_mode = #tpu.pipeline_mode<synchronous>, transform_indices = @transform_4, window_bounds = array<i64: 1, 32>}, {pipeline_mode = #tpu.pipeline_mode<synchronous>, transform_indices = @transform_5, window_bounds = array<i64: 1, 32>}, {pipeline_mode = #tpu.pipeline_mode<synchronous>, transform_indices = @transform_6, window_bounds = array<i64: 32, 32>}, {pipeline_mode = #tpu.pipeline_mode<synchronous>, transform_indices = @transform_7, window_bounds = array<i64: 32, 32>}, {pipeline_mode = #tpu.pipeline_mode<synchronous>, transform_indices = @transform_8, window_bounds = array<i64: 32, 32>}, {pipeline_mode = #tpu.pipeline_mode<synchronous>, transform_indices = @transform_9, window_bounds = array<i64: 32, 32>}, {pipeline_mode = #tpu.pipeline_mode<synchronous>, transform_indices = @transform_10, window_bounds = array<i64: 1, 32>}, {pipeline_mode = #tpu.pipeline_mode<synchronous>, transform_indices = @transform_11, window_bounds = array<i64: 1, 32>}, {pipeline_mode = #tpu.pipeline_mode<synchronous>, transform_indices = @transform_12, window_bounds = array<i64: 32, 64>}, {pipeline_mode = #tpu.pipeline_mode<synchronous>, transform_indices = @transform_13, window_bounds = array<i64: 1, 64>}, {pipeline_mode = #tpu.pipeline_mode<synchronous>, transform_indices = @transform_14, window_bounds = array<i64: 64, 32>}, {pipeline_mode = #tpu.pipeline_mode<synchronous>, transform_indices = @transform_15, window_bounds = array<i64: 1, 32>}, {pipeline_mode = #tpu.pipeline_mode<synchronous>, transform_indices = @transform_16, window_bounds = array<i64: 16, 32>}]} {
    %c0 = arith.constant 0 : index
    %c0_0 = arith.constant 0 : index
    %0 = vector.load %arg1[%c0, %c0_0] : memref<16x32xf32, #tpu.memory_space<vmem>>, vector<16x32xf32>
    %c0_1 = arith.constant 0 : index
    %c0_2 = arith.constant 0 : index
    %1 = vector.load %arg3[%c0_1, %c0_2] : memref<32x32xf32, #tpu.memory_space<vmem>>, vector<32x32xf32>
    %c0_3 = arith.constant 0 : index
    %c0_4 = arith.constant 0 : index
    %2 = vector.load %arg4[%c0_3, %c0_4] : memref<32x32xf32, #tpu.memory_space<vmem>>, vector<32x32xf32>
    %c0_5 = arith.constant 0 : index
    %c0_6 = arith.constant 0 : index
    %3 = vector.load %arg5[%c0_5, %c0_6] : memref<1x32xf32, #tpu.memory_space<vmem>>, vector<1x32xf32>
    %c0_7 = arith.constant 0 : index
    %c0_8 = arith.constant 0 : index
    %4 = vector.load %arg6[%c0_7, %c0_8] : memref<1x32xf32, #tpu.memory_space<vmem>>, vector<1x32xf32>
    %c0_9 = arith.constant 0 : index
    %c0_10 = arith.constant 0 : index
    %5 = vector.load %arg11[%c0_9, %c0_10] : memref<1x32xf32, #tpu.memory_space<vmem>>, vector<1x32xf32>
    %c0_11 = arith.constant 0 : index
    %c0_12 = arith.constant 0 : index
    %6 = vector.load %arg12[%c0_11, %c0_12] : memref<1x32xf32, #tpu.memory_space<vmem>>, vector<1x32xf32>
    %c0_13 = arith.constant 0 : index
    %c0_14 = arith.constant 0 : index
    %7 = vector.load %arg14[%c0_13, %c0_14] : memref<1x64xf32, #tpu.memory_space<vmem>>, vector<1x64xf32>
    %c0_15 = arith.constant 0 : index
    %c0_16 = arith.constant 0 : index
    %8 = vector.load %arg16[%c0_15, %c0_16] : memref<1x32xf32, #tpu.memory_space<vmem>>, vector<1x32xf32>
    %cst = arith.constant dense<0.000000e+00> : vector<16xf32>
    %9 = vector.multi_reduction <add>, %0, %cst [1] : vector<16x32xf32> to vector<16xf32>
    %10 = vector.shape_cast %9 : vector<16xf32> to vector<16x1xf32>
    %cst_17 = arith.constant 3.200000e+01 : f32
    %11 = vector.broadcast %cst_17 : f32 to vector<16x1xf32>
    %12 = arith.divf %10, %11 : vector<16x1xf32>
    %13 = vector.broadcast %12 : vector<16x1xf32> to vector<16x32xf32>
    %14 = arith.subf %0, %13 : vector<16x32xf32>
    %15 = arith.mulf %14, %14 : vector<16x32xf32>
    %cst_18 = arith.constant dense<0.000000e+00> : vector<16xf32>
    %16 = vector.multi_reduction <add>, %15, %cst_18 [1] : vector<16x32xf32> to vector<16xf32>
    %17 = vector.shape_cast %16 : vector<16xf32> to vector<16x1xf32>
    %cst_19 = arith.constant 3.100000e+01 : f32
    %18 = vector.broadcast %cst_19 : f32 to vector<16x1xf32>
    %19 = arith.divf %17, %18 : vector<16x1xf32>
    %20 = math.sqrt %19 : vector<16x1xf32>
    %cst_20 = arith.constant 9.99999997E-7 : f32
    %21 = vector.broadcast %cst_20 : f32 to vector<16x1xf32>
    %22 = arith.addf %20, %21 : vector<16x1xf32>
    %23 = tpu.reciprocal %22 {approx = true} : vector<16x1xf32> -> vector<16x1xf32>
    %24 = vector.broadcast %12 : vector<16x1xf32> to vector<16x32xf32>
    %25 = arith.subf %0, %24 : vector<16x32xf32>
    %26 = vector.broadcast %3 : vector<1x32xf32> to vector<16x32xf32>
    %27 = arith.mulf %26, %25 : vector<16x32xf32>
    %28 = vector.broadcast %23 : vector<16x1xf32> to vector<16x32xf32>
    %29 = arith.mulf %27, %28 : vector<16x32xf32>
    %30 = vector.broadcast %4 : vector<1x32xf32> to vector<16x32xf32>
    %31 = arith.addf %29, %30 : vector<16x32xf32>
    %c0_21 = arith.constant 0 : index
    %c0_22 = arith.constant 0 : index
    %32 = vector.load %arg7[%c0_21, %c0_22] : memref<32x32xf32, #tpu.memory_space<vmem>>, vector<32x32xf32>
    %cst_23 = arith.constant dense<0.000000e+00> : vector<16x32xf32>
    %33 = tpu.matmul %31, %32, %cst_23 {dimension_numbers = #tpu.dot_dimension_numbers<[1], [0], [0], [1], [0, 0, 1, 1], [], []>} : vector<16x32xf32>, vector<32x32xf32>, vector<16x32xf32> -> vector<16x32xf32>
    %cst_24 = arith.constant 0.353553385 : f32
    %34 = vector.broadcast %cst_24 : f32 to vector<16x32xf32>
    %35 = arith.mulf %33, %34 : vector<16x32xf32>
    %c0_25 = arith.constant 0 : index
    %c0_26 = arith.constant 0 : index
    %36 = vector.load %arg8[%c0_25, %c0_26] : memref<32x32xf32, #tpu.memory_space<vmem>>, vector<32x32xf32>
    %cst_27 = arith.constant dense<0.000000e+00> : vector<16x32xf32>
    %37 = tpu.matmul %31, %36, %cst_27 {dimension_numbers = #tpu.dot_dimension_numbers<[1], [0], [0], [1], [0, 0, 1, 1], [], []>} : vector<16x32xf32>, vector<32x32xf32>, vector<16x32xf32> -> vector<16x32xf32>
    %c0_28 = arith.constant 0 : index
    %c0_29 = arith.constant 0 : index
    %38 = vector.load %arg9[%c0_28, %c0_29] : memref<32x32xf32, #tpu.memory_space<vmem>>, vector<32x32xf32>
    %cst_30 = arith.constant dense<0.000000e+00> : vector<16x32xf32>
    %39 = tpu.matmul %31, %38, %cst_30 {dimension_numbers = #tpu.dot_dimension_numbers<[1], [0], [0], [1], [0, 0, 1, 1], [], []>} : vector<16x32xf32>, vector<32x32xf32>, vector<16x32xf32> -> vector<16x32xf32>
    %40 = vector.extract_strided_slice %35 {offsets = [0, 0], sizes = [8, 32], strides = [1, 1]} : vector<16x32xf32> to vector<8x32xf32>
    %41 = vector.extract_strided_slice %37 {offsets = [0, 0], sizes = [8, 32], strides = [1, 1]} : vector<16x32xf32> to vector<8x32xf32>
    %42 = vector.extract_strided_slice %39 {offsets = [0, 0], sizes = [8, 32], strides = [1, 1]} : vector<16x32xf32> to vector<8x32xf32>
    %c0_31 = arith.constant 0 : index
    %c0_32 = arith.constant 0 : index
    %c0_33 = arith.constant 0 : index
    %43 = vector.load %arg2[%c0_31, %c0_32, %c0_33] : memref<2x8x32xi32, #tpu.memory_space<vmem>>, vector<1x8x32xi32>
    %44 = vector.shape_cast %43 : vector<1x8x32xi32> to vector<8x32xi32>
    %45 = tpu.concatenate %41, %41, %41, %41 in 0 : vector<8x32xf32>, vector<8x32xf32>, vector<8x32xf32>, vector<8x32xf32> -> vector<32x32xf32>
    %46 = arith.mulf %45, %1 : vector<32x32xf32>
    %47 = tpu.concatenate %42, %42, %42, %42 in 0 : vector<8x32xf32>, vector<8x32xf32>, vector<8x32xf32>, vector<8x32xf32> -> vector<32x32xf32>
    %48 = arith.mulf %47, %1 : vector<32x32xf32>
    %cst_34 = arith.constant dense<0.000000e+00> : vector<8x32xf32>
    %49 = tpu.matmul %40, %46, %cst_34 {dimension_numbers = #tpu.dot_dimension_numbers<[1], [1], [0], [0], [0, 0, 1, 0], [], []>} : vector<8x32xf32>, vector<32x32xf32>, vector<8x32xf32> -> vector<8x32xf32>
    %c0_i32 = arith.constant 0 : i32
    %50 = vector.broadcast %c0_i32 : i32 to vector<8x32xi32>
    %51 = arith.cmpi eq, %44, %50 : vector<8x32xi32>
    %cst_35 = arith.constant -1.000000e+09 : f32
    %52 = vector.broadcast %cst_35 : f32 to vector<8x32xf32>
    %53 = arith.select %51, %52, %49 : vector<8x32xi1>, vector<8x32xf32>
    %cst_36 = arith.constant dense<0xFF800000> : vector<8xf32>
    %54 = vector.multi_reduction <maximumf>, %53, %cst_36 [1] : vector<8x32xf32> to vector<8xf32>
    %55 = vector.shape_cast %54 : vector<8xf32> to vector<8x1xf32>
    %56 = vector.broadcast %55 : vector<8x1xf32> to vector<8x32xf32>
    %57 = arith.subf %53, %56 : vector<8x32xf32>
    %58 = math.exp %57 : vector<8x32xf32>
    %cst_37 = arith.constant dense<0.000000e+00> : vector<8x32xf32>
    %59 = tpu.matmul %58, %2, %cst_37 {dimension_numbers = #tpu.dot_dimension_numbers<[1], [0], [0], [1], [0, 0, 1, 1], [], []>} : vector<8x32xf32>, vector<32x32xf32>, vector<8x32xf32> -> vector<8x32xf32>
    %60 = tpu.reciprocal %59 {approx = true} : vector<8x32xf32> -> vector<8x32xf32>
    %61 = arith.mulf %58, %60 : vector<8x32xf32>
    %cst_38 = arith.constant dense<0.000000e+00> : vector<8x32xf32>
    %62 = tpu.matmul %61, %48, %cst_38 {dimension_numbers = #tpu.dot_dimension_numbers<[1], [0], [0], [1], [0, 0, 1, 1], [], []>} : vector<8x32xf32>, vector<32x32xf32>, vector<8x32xf32> -> vector<8x32xf32>
    %63 = vector.extract_strided_slice %35 {offsets = [8, 0], sizes = [8, 32], strides = [1, 1]} : vector<16x32xf32> to vector<8x32xf32>
    %64 = vector.extract_strided_slice %37 {offsets = [8, 0], sizes = [8, 32], strides = [1, 1]} : vector<16x32xf32> to vector<8x32xf32>
    %65 = vector.extract_strided_slice %39 {offsets = [8, 0], sizes = [8, 32], strides = [1, 1]} : vector<16x32xf32> to vector<8x32xf32>
    %c1 = arith.constant 1 : index
    %c0_39 = arith.constant 0 : index
    %c0_40 = arith.constant 0 : index
    %66 = vector.load %arg2[%c1, %c0_39, %c0_40] : memref<2x8x32xi32, #tpu.memory_space<vmem>>, vector<1x8x32xi32>
    %67 = vector.shape_cast %66 : vector<1x8x32xi32> to vector<8x32xi32>
    %68 = tpu.concatenate %64, %64, %64, %64 in 0 : vector<8x32xf32>, vector<8x32xf32>, vector<8x32xf32>, vector<8x32xf32> -> vector<32x32xf32>
    %69 = arith.mulf %68, %1 : vector<32x32xf32>
    %70 = tpu.concatenate %65, %65, %65, %65 in 0 : vector<8x32xf32>, vector<8x32xf32>, vector<8x32xf32>, vector<8x32xf32> -> vector<32x32xf32>
    %71 = arith.mulf %70, %1 : vector<32x32xf32>
    %cst_41 = arith.constant dense<0.000000e+00> : vector<8x32xf32>
    %72 = tpu.matmul %63, %69, %cst_41 {dimension_numbers = #tpu.dot_dimension_numbers<[1], [1], [0], [0], [0, 0, 1, 0], [], []>} : vector<8x32xf32>, vector<32x32xf32>, vector<8x32xf32> -> vector<8x32xf32>
    %c0_i32_42 = arith.constant 0 : i32
    %73 = vector.broadcast %c0_i32_42 : i32 to vector<8x32xi32>
    %74 = arith.cmpi eq, %67, %73 : vector<8x32xi32>
    %cst_43 = arith.constant -1.000000e+09 : f32
    %75 = vector.broadcast %cst_43 : f32 to vector<8x32xf32>
    %76 = arith.select %74, %75, %72 : vector<8x32xi1>, vector<8x32xf32>
    %cst_44 = arith.constant dense<0xFF800000> : vector<8xf32>
    %77 = vector.multi_reduction <maximumf>, %76, %cst_44 [1] : vector<8x32xf32> to vector<8xf32>
    %78 = vector.shape_cast %77 : vector<8xf32> to vector<8x1xf32>
    %79 = vector.broadcast %78 : vector<8x1xf32> to vector<8x32xf32>
    %80 = arith.subf %76, %79 : vector<8x32xf32>
    %81 = math.exp %80 : vector<8x32xf32>
    %cst_45 = arith.constant dense<0.000000e+00> : vector<8x32xf32>
    %82 = tpu.matmul %81, %2, %cst_45 {dimension_numbers = #tpu.dot_dimension_numbers<[1], [0], [0], [1], [0, 0, 1, 1], [], []>} : vector<8x32xf32>, vector<32x32xf32>, vector<8x32xf32> -> vector<8x32xf32>
    %83 = tpu.reciprocal %82 {approx = true} : vector<8x32xf32> -> vector<8x32xf32>
    %84 = arith.mulf %81, %83 : vector<8x32xf32>
    %cst_46 = arith.constant dense<0.000000e+00> : vector<8x32xf32>
    %85 = tpu.matmul %84, %71, %cst_46 {dimension_numbers = #tpu.dot_dimension_numbers<[1], [0], [0], [1], [0, 0, 1, 1], [], []>} : vector<8x32xf32>, vector<32x32xf32>, vector<8x32xf32> -> vector<8x32xf32>
    %86 = tpu.concatenate %62, %85 in 0 : vector<8x32xf32>, vector<8x32xf32> -> vector<16x32xf32>
    %c0_47 = arith.constant 0 : index
    %c0_48 = arith.constant 0 : index
    %87 = vector.load %arg10[%c0_47, %c0_48] : memref<32x32xf32, #tpu.memory_space<vmem>>, vector<32x32xf32>
    %cst_49 = arith.constant dense<0.000000e+00> : vector<16x32xf32>
    %88 = tpu.matmul %86, %87, %cst_49 {dimension_numbers = #tpu.dot_dimension_numbers<[1], [0], [0], [1], [0, 0, 1, 1], [], []>} : vector<16x32xf32>, vector<32x32xf32>, vector<16x32xf32> -> vector<16x32xf32>
    %89 = arith.addf %0, %88 : vector<16x32xf32>
    %cst_50 = arith.constant dense<0.000000e+00> : vector<16xf32>
    %90 = vector.multi_reduction <add>, %89, %cst_50 [1] : vector<16x32xf32> to vector<16xf32>
    %91 = vector.shape_cast %90 : vector<16xf32> to vector<16x1xf32>
    %cst_51 = arith.constant 3.200000e+01 : f32
    %92 = vector.broadcast %cst_51 : f32 to vector<16x1xf32>
    %93 = arith.divf %91, %92 : vector<16x1xf32>
    %94 = vector.broadcast %93 : vector<16x1xf32> to vector<16x32xf32>
    %95 = arith.subf %89, %94 : vector<16x32xf32>
    %96 = arith.mulf %95, %95 : vector<16x32xf32>
    %cst_52 = arith.constant dense<0.000000e+00> : vector<16xf32>
    %97 = vector.multi_reduction <add>, %96, %cst_52 [1] : vector<16x32xf32> to vector<16xf32>
    %98 = vector.shape_cast %97 : vector<16xf32> to vector<16x1xf32>
    %cst_53 = arith.constant 3.100000e+01 : f32
    %99 = vector.broadcast %cst_53 : f32 to vector<16x1xf32>
    %100 = arith.divf %98, %99 : vector<16x1xf32>
    %101 = math.sqrt %100 : vector<16x1xf32>
    %cst_54 = arith.constant 9.99999997E-7 : f32
    %102 = vector.broadcast %cst_54 : f32 to vector<16x1xf32>
    %103 = arith.addf %101, %102 : vector<16x1xf32>
    %104 = tpu.reciprocal %103 {approx = true} : vector<16x1xf32> -> vector<16x1xf32>
    %105 = vector.broadcast %93 : vector<16x1xf32> to vector<16x32xf32>
    %106 = arith.subf %89, %105 : vector<16x32xf32>
    %107 = vector.broadcast %5 : vector<1x32xf32> to vector<16x32xf32>
    %108 = arith.mulf %107, %106 : vector<16x32xf32>
    %109 = vector.broadcast %104 : vector<16x1xf32> to vector<16x32xf32>
    %110 = arith.mulf %108, %109 : vector<16x32xf32>
    %111 = vector.broadcast %6 : vector<1x32xf32> to vector<16x32xf32>
    %112 = arith.addf %110, %111 : vector<16x32xf32>
    %c0_55 = arith.constant 0 : index
    %c0_56 = arith.constant 0 : index
    %113 = vector.load %arg13[%c0_55, %c0_56] : memref<32x64xf32, #tpu.memory_space<vmem>>, vector<32x64xf32>
    %cst_57 = arith.constant dense<0.000000e+00> : vector<16x64xf32>
    %114 = tpu.matmul %112, %113, %cst_57 {dimension_numbers = #tpu.dot_dimension_numbers<[1], [0], [0], [1], [0, 0, 1, 1], [], []>} : vector<16x32xf32>, vector<32x64xf32>, vector<16x64xf32> -> vector<16x64xf32>
    %115 = vector.broadcast %7 : vector<1x64xf32> to vector<16x64xf32>
    %116 = arith.addf %114, %115 : vector<16x64xf32>
    %cst_58 = arith.constant 0.000000e+00 : f32
    %117 = vector.broadcast %cst_58 : f32 to vector<16x64xf32>
    %118 = arith.maximumf %116, %117 : vector<16x64xf32>
    %c0_59 = arith.constant 0 : index
    %c0_60 = arith.constant 0 : index
    %119 = vector.load %arg15[%c0_59, %c0_60] : memref<64x32xf32, #tpu.memory_space<vmem>>, vector<64x32xf32>
    %cst_61 = arith.constant dense<0.000000e+00> : vector<16x32xf32>
    %120 = tpu.matmul %118, %119, %cst_61 {dimension_numbers = #tpu.dot_dimension_numbers<[1], [0], [0], [1], [0, 0, 1, 1], [], []>} : vector<16x64xf32>, vector<64x32xf32>, vector<16x32xf32> -> vector<16x32xf32>
    %121 = vector.broadcast %8 : vector<1x32xf32> to vector<16x32xf32>
    %122 = arith.addf %120, %121 : vector<16x32xf32>
    %123 = arith.addf %89, %122 : vector<16x32xf32>
    %c0_62 = arith.constant 0 : index
    %c0_63 = arith.constant 0 : index
    %124 = vector.load %arg17[%c0_62, %c0_63] : memref<16x32xf32, #tpu.memory_space<vmem>>, vector<16x32xf32>
    tpu.vector_store %arg17[%c0_62, %c0_63], %123 {strides = array<i32>} : memref<16x32xf32, #tpu.memory_space<vmem>>, vector<16x32xf32>,
    return
  }
  func.func @transform_0(%arg0: i32) -> (i32, i32) {
    %c0_i32 = arith.constant 0 : i32
    %c0_i32_0 = arith.constant 0 : i32
    %c0_i32_1 = arith.constant 0 : i32
    return %c0_i32, %c0_i32_0 : i32, i32
  }
  func.func @transform_1(%arg0: i32) -> (i32, i32, i32) {
    %c0_i32 = arith.constant 0 : i32
    %c0_i32_0 = arith.constant 0 : i32
    %c0_i32_1 = arith.constant 0 : i32
    %c0_i32_2 = arith.constant 0 : i32
    return %c0_i32, %c0_i32_0, %c0_i32_1 : i32, i32, i32
  }
  func.func @transform_2(%arg0: i32) -> (i32, i32) {
    %c0_i32 = arith.constant 0 : i32
    %c0_i32_0 = arith.constant 0 : i32
    %c0_i32_1 = arith.constant 0 : i32
    return %c0_i32, %c0_i32_0 : i32, i32
  }
  func.func @transform_3(%arg0: i32) -> (i32, i32) {
    %c0_i32 = arith.constant 0 : i32
    %c0_i32_0 = arith.constant 0 : i32
    %c0_i32_1 = arith.constant 0 : i32
    return %c0_i32, %c0_i32_0 : i32, i32
  }
  func.func @transform_4(%arg0: i32) -> (i32, i32) {
    %c0_i32 = arith.constant 0 : i32
    %c0_i32_0 = arith.constant 0 : i32
    %c0_i32_1 = arith.constant 0 : i32
    return %c0_i32, %c0_i32_0 : i32, i32
  }
  func.func @transform_5(%arg0: i32) -> (i32, i32) {
    %c0_i32 = arith.constant 0 : i32
    %c0_i32_0 = arith.constant 0 : i32
    %c0_i32_1 = arith.constant 0 : i32
    return %c0_i32, %c0_i32_0 : i32, i32
  }
  func.func @transform_6(%arg0: i32) -> (i32, i32) {
    %c0_i32 = arith.constant 0 : i32
    %c0_i32_0 = arith.constant 0 : i32
    %c0_i32_1 = arith.constant 0 : i32
    return %c0_i32, %c0_i32_0 : i32, i32
  }
  func.func @transform_7(%arg0: i32) -> (i32, i32) {
    %c0_i32 = arith.constant 0 : i32
    %c0_i32_0 = arith.constant 0 : i32
    %c0_i32_1 = arith.constant 0 : i32
    return %c0_i32, %c0_i32_0 : i32, i32
  }
  func.func @transform_8(%arg0: i32) -> (i32, i32) {
    %c0_i32 = arith.constant 0 : i32
    %c0_i32_0 = arith.constant 0 : i32
    %c0_i32_1 = arith.constant 0 : i32
    return %c0_i32, %c0_i32_0 : i32, i32
  }
  func.func @transform_9(%arg0: i32) -> (i32, i32) {
    %c0_i32 = arith.constant 0 : i32
    %c0_i32_0 = arith.constant 0 : i32
    %c0_i32_1 = arith.constant 0 : i32
    return %c0_i32, %c0_i32_0 : i32, i32
  }
  func.func @transform_10(%arg0: i32) -> (i32, i32) {
    %c0_i32 = arith.constant 0 : i32
    %c0_i32_0 = arith.constant 0 : i32
    %c0_i32_1 = arith.constant 0 : i32
    return %c0_i32, %c0_i32_0 : i32, i32
  }
  func.func @transform_11(%arg0: i32) -> (i32, i32) {
    %c0_i32 = arith.constant 0 : i32
    %c0_i32_0 = arith.constant 0 : i32
    %c0_i32_1 = arith.constant 0 : i32
    return %c0_i32, %c0_i32_0 : i32, i32
  }
  func.func @transform_12(%arg0: i32) -> (i32, i32) {
    %c0_i32 = arith.constant 0 : i32
    %c0_i32_0 = arith.constant 0 : i32
    %c0_i32_1 = arith.constant 0 : i32
    return %c0_i32, %c0_i32_0 : i32, i32
  }
  func.func @transform_13(%arg0: i32) -> (i32, i32) {
    %c0_i32 = arith.constant 0 : i32
    %c0_i32_0 = arith.constant 0 : i32
    %c0_i32_1 = arith.constant 0 : i32
    return %c0_i32, %c0_i32_0 : i32, i32
  }
  func.func @transform_14(%arg0: i32) -> (i32, i32) {
    %c0_i32 = arith.constant 0 : i32
    %c0_i32_0 = arith.constant 0 : i32
    %c0_i32_1 = arith.constant 0 : i32
    return %c0_i32, %c0_i32_0 : i32, i32
  }
  func.func @transform_15(%arg0: i32) -> (i32, i32) {
    %c0_i32 = arith.constant 0 : i32
    %c0_i32_0 = arith.constant 0 : i32
    %c0_i32_1 = arith.constant 0 : i32
    return %c0_i32, %c0_i32_0 : i32, i32
  }
  func.func @transform_16(%arg0: i32) -> (i32, i32) {
    %c0_i32 = arith.constant 0 : i32
    %c0_i32_0 = arith.constant 0 : i32
    %c0_i32_1 = arith.constant 0 : i32
    return %c0_i32, %c0_i32_0 : i32, i32
  }
}

</mosaic_0001>

<llo_original>
// kernel: tpu_custom_call.1
$region0: #{tpu_custom_call.1}
  #allocation0 [shape = 'u32[]', space=smem, size = 0x4, offset = 0x4, fixed_abs, tag = 'smem constant byte address 0x4 - core index']
  #allocation1 [shape = 'u32[144,128]{1,0:T(1,128)}', space=vmem, size = 0x12000, scoped, tag = 'internal scratch']
  %s0 = inlined_call_operand.hbm [shape: f32[16,32], index: 0, kind: input, shape index: {}]
  %s1 = inlined_call_operand.hbm [shape: s32[2,8,32], index: 1, kind: input, shape index: {}]
  %s2 = inlined_call_operand.vmem [shape: f32[32,32], index: 2, kind: input, shape index: {}]
  %s3 = inlined_call_operand.vmem [shape: f32[32,32], index: 3, kind: input, shape index: {}]
  %s4 = inlined_call_operand.vmem [shape: f32[1,32], index: 4, kind: input, shape index: {}]
  %s5 = inlined_call_operand.vmem [shape: f32[1,32], index: 5, kind: input, shape index: {}]
  %s6 = inlined_call_operand.vmem [shape: f32[32,32], index: 6, kind: input, shape index: {}]
  %s7 = inlined_call_operand.hbm [shape: f32[32,32], index: 7, kind: input, shape index: {}]
  %s8 = inlined_call_operand.hbm [shape: f32[32,32], index: 8, kind: input, shape index: {}]
  %s9 = inlined_call_operand.hbm [shape: f32[32,32], index: 9, kind: input, shape index: {}]
  %s10 = inlined_call_operand.vmem [shape: f32[1,32], index: 10, kind: input, shape index: {}]
  %s11 = inlined_call_operand.vmem [shape: f32[1,32], index: 11, kind: input, shape index: {}]
  %s12 = inlined_call_operand.hbm [shape: f32[32,64], index: 12, kind: input, shape index: {}]
  %s13 = inlined_call_operand.vmem [shape: f32[1,64], index: 13, kind: input, shape index: {}]
  %s14 = inlined_call_operand.vmem [shape: f32[64,32], index: 14, kind: input, shape index: {}]
  %s15 = inlined_call_operand.vmem [shape: f32[1,32], index: 15, kind: input, shape index: {}]
  %s16 = inlined_call_operand.hbm [shape: f32[16,32], index: 16, kind: output, shape index: {}]
  %s17 = sld [smem:[#allocation0]]
  $region98: #{tpu_custom_call.1} parent=0
    _
  %s19 = ssub.s32 1, %s17
  %s20 = scalar_select 0, %s19, %s17
  $region1: #{tpu_custom_call.1} parent=0
    #allocation2 [shape = 'u8[8192]{0}', space=vmem, size = 0x2000, scoped, tag = 'input window, operand 0, single buffered']
    #allocation3 [shape = 's32[1]{0}', space=sflag, size = 0x4, scoped, tag = 'scoped memory for tpu_custom_call.1']
    #allocation4 [shape = 's32[1]{0}', space=sflag, size = 0x4, scoped, tag = 'scoped memory for tpu_custom_call.1']
    #allocation5 [shape = 'u8[8192]{0}', space=vmem, size = 0x2000, scoped, tag = 'input window, operand 1, single buffered']
    #allocation6 [shape = 's32[1]{0}', space=sflag, size = 0x4, scoped, tag = 'scoped memory for tpu_custom_call.1']
    #allocation7 [shape = 'u8[16384]{0}', space=vmem, size = 0x4000, scoped, tag = 'input window, operand 7, single buffered']
    #allocation8 [shape = 'u8[16384]{0}', space=vmem, size = 0x4000, scoped, tag = 'input window, operand 8, single buffered']
    #allocation9 [shape = 's32[1]{0}', space=sflag, size = 0x4, scoped, tag = 'scoped memory for tpu_custom_call.1']
    #allocation10 [shape = 'u8[16384]{0}', space=vmem, size = 0x4000, scoped, tag = 'input window, operand 9, single buffered']
    #allocation11 [shape = 'u8[16384]{0}', space=vmem, size = 0x4000, scoped, tag = 'input window, operand 12, single buffered']
    #allocation12 [shape = 's32[1]{0}', space=sflag, size = 0x4, scoped, tag = 'scoped memory for tpu_custom_call.1']
    #allocation13 [shape = 'u8[8192]{0}', space=vmem, size = 0x2000, scoped, tag = 'output window, operand 0, single buffered']
    %21 = vsyncpa [#allocation3], 0
    %22 = vsyncpa [#allocation6], 0
    %23 = vsyncpa [#allocation9], 0
    %24 = vsyncpa [#allocation12], 0
    %25 = vsyncpa [#allocation4], 0
    // Predicated region
    $region2: #{tpu_custom_call.1} parent=1 // pred_check
      _
    $region3: #{tpu_custom_call.1} parent=1 // pred_check_branch
      %27 = sbr.rel (0) target = $region5
    $region4: #{tpu_custom_call.1} parent=1 // pred_region
      %s29 = ssub.s32 256, 256
      %30 = vsyncadd [#allocation3], %s29
      %s31 = sshll.u32 [#allocation2], 4
      %s32 = int_to_ptr.vmem [resolvable:$true] %s31
      %37 = dma.hbm_to_vmem [thread:$0]  %s0, 256, %s32, [#allocation3], 128, 128, 8
    $region5: #{tpu_custom_call.1} parent=1 // pred_fallthru
      _
    // Predicated region
    $region6: #{tpu_custom_call.1} parent=1 // pred_check
      _
    $region7: #{tpu_custom_call.1} parent=1 // pred_check_branch
      %39 = sbr.rel (0) target = $region9
    $region8: #{tpu_custom_call.1} parent=1 // pred_region
      %s41 = ssub.s32 256, 256
      %42 = vsyncadd [#allocation6], %s41
      %s43 = sshll.u32 [#allocation5], 4
      %s44 = int_to_ptr.vmem [resolvable:$true] %s43
      %49 = dma.hbm_to_vmem [thread:$0]  %s1, 256, %s44, [#allocation6], 128, 128, 8
    $region9: #{tpu_custom_call.1} parent=1 // pred_fallthru
      _
    // Predicated region
    $region10: #{tpu_custom_call.1} parent=1 // pred_check
      _
    $region11: #{tpu_custom_call.1} parent=1 // pred_check_branch
      %51 = sbr.rel (0) target = $region13
    $region12: #{tpu_custom_call.1} parent=1 // pred_region
      _
    $region13: #{tpu_custom_call.1} parent=1 // pred_fallthru
      _
    // Predicated region
    $region14: #{tpu_custom_call.1} parent=1 // pred_check
      _
    $region15: #{tpu_custom_call.1} parent=1 // pred_check_branch
      %53 = sbr.rel (0) target = $region17
    $region16: #{tpu_custom_call.1} parent=1 // pred_region
      _
    $region17: #{tpu_custom_call.1} parent=1 // pred_fallthru
      _
    // Predicated region
    $region18: #{tpu_custom_call.1} parent=1 // pred_check
      _
    $region19: #{tpu_custom_call.1} parent=1 // pred_check_branch
      %55 = sbr.rel (0) target = $region21
    $region20: #{tpu_custom_call.1} parent=1 // pred_region
      _
    $region21: #{tpu_custom_call.1} parent=1 // pred_fallthru
      _
    // Predicated region
    $region22: #{tpu_custom_call.1} parent=1 // pred_check
      _
    $region23: #{tpu_custom_call.1} parent=1 // pred_check_branch
      %57 = sbr.rel (0) target = $region25
    $region24: #{tpu_custom_call.1} parent=1 // pred_region
      _
    $region25: #{tpu_custom_call.1} parent=1 // pred_fallthru
      _
    // Predicated region
    $region26: #{tpu_custom_call.1} parent=1 // pred_check
      _
    $region27: #{tpu_custom_call.1} parent=1 // pred_check_branch
      %59 = sbr.rel (0) target = $region29
    $region28: #{tpu_custom_call.1} parent=1 // pred_region
      _
    $region29: #{tpu_custom_call.1} parent=1 // pred_fallthru
      _
    // Predicated region
    $region30: #{tpu_custom_call.1} parent=1 // pred_check
      _
    $region31: #{tpu_custom_call.1} parent=1 // pred_check_branch
      %61 = sbr.rel (0) target = $region33
    $region32: #{tpu_custom_call.1} parent=1 // pred_region
      %s63 = ssub.s32 512, 512
      %64 = vsyncadd [#allocation6], %s63
      %s65 = sshll.u32 [#allocation7], 4
      %s66 = int_to_ptr.vmem [resolvable:$true] %s65
      %71 = dma.hbm_to_vmem [thread:$0]  %s7, 512, %s66, [#allocation6], 128, 128, 8
    $region33: #{tpu_custom_call.1} parent=1 // pred_fallthru
      _
    // Predicated region
    $region34: #{tpu_custom_call.1} parent=1 // pred_check
      _
    $region35: #{tpu_custom_call.1} parent=1 // pred_check_branch
      %73 = sbr.rel (0) target = $region37
    $region36: #{tpu_custom_call.1} parent=1 // pred_region
      %s75 = ssub.s32 512, 512
      %76 = vsyncadd [#allocation9], %s75
      %s77 = sshll.u32 [#allocation8], 4
      %s78 = int_to_ptr.vmem [resolvable:$true] %s77
      %83 = dma.hbm_to_vmem [thread:$0]  %s8, 512, %s78, [#allocation9], 128, 128, 8
    $region37: #{tpu_custom_call.1} parent=1 // pred_fallthru
      _
    // Predicated region
    $region38: #{tpu_custom_call.1} parent=1 // pred_check
      _
    $region39: #{tpu_custom_call.1} parent=1 // pred_check_branch
      %85 = sbr.rel (0) target = $region41
    $region40: #{tpu_custom_call.1} parent=1 // pred_region
      %s87 = ssub.s32 512, 512
      %88 = vsyncadd [#allocation9], %s87
      %s89 = sshll.u32 [#allocation10], 4
      %s90 = int_to_ptr.vmem [resolvable:$true] %s89
      %95 = dma.hbm_to_vmem [thread:$0]  %s9, 512, %s90, [#allocation9], 128, 128, 8
    $region41: #{tpu_custom_call.1} parent=1 // pred_fallthru
      _
    // Predicated region
    $region42: #{tpu_custom_call.1} parent=1 // pred_check
      _
    $region43: #{tpu_custom_call.1} parent=1 // pred_check_branch
      %97 = sbr.rel (0) target = $region45
    $region44: #{tpu_custom_call.1} parent=1 // pred_region
      _
    $region45: #{tpu_custom_call.1} parent=1 // pred_fallthru
      _
    // Predicated region
    $region46: #{tpu_custom_call.1} parent=1 // pred_check
      _
    $region47: #{tpu_custom_call.1} parent=1 // pred_check_branch
      %99 = sbr.rel (0) target = $region49
    $region48: #{tpu_custom_call.1} parent=1 // pred_region
      _
    $region49: #{tpu_custom_call.1} parent=1 // pred_fallthru
      _
    // Predicated region
    $region50: #{tpu_custom_call.1} parent=1 // pred_check
      _
    $region51: #{tpu_custom_call.1} parent=1 // pred_check_branch
      %101 = sbr.rel (0) target = $region53
    $region52: #{tpu_custom_call.1} parent=1 // pred_region
      %s103 = ssub.s32 512, 512
      %104 = vsyncadd [#allocation12], %s103
      %s105 = sshll.u32 [#allocation11], 4
      %s106 = int_to_ptr.vmem [resolvable:$true] %s105
      %111 = dma.hbm_to_vmem [thread:$0]  %s12, 512, %s106, [#allocation12], 128, 128, 8
    $region53: #{tpu_custom_call.1} parent=1 // pred_fallthru
      _
    // Predicated region
    $region54: #{tpu_custom_call.1} parent=1 // pred_check
      _
    $region55: #{tpu_custom_call.1} parent=1 // pred_check_branch
      %113 = sbr.rel (0) target = $region57
    $region56: #{tpu_custom_call.1} parent=1 // pred_region
      _
    $region57: #{tpu_custom_call.1} parent=1 // pred_fallthru
      _
    // Predicated region
    $region58: #{tpu_custom_call.1} parent=1 // pred_check
      _
    $region59: #{tpu_custom_call.1} parent=1 // pred_check_branch
      %115 = sbr.rel (0) target = $region61
    $region60: #{tpu_custom_call.1} parent=1 // pred_region
      _
    $region61: #{tpu_custom_call.1} parent=1 // pred_fallthru
      _
    // Predicated region
    $region62: #{tpu_custom_call.1} parent=1 // pred_check
      _
    $region63: #{tpu_custom_call.1} parent=1 // pred_check_branch
      %117 = sbr.rel (0) target = $region65
    $region64: #{tpu_custom_call.1} parent=1 // pred_region
      _
    $region65: #{tpu_custom_call.1} parent=1 // pred_fallthru
      _
    // Predicated region
    $region66: #{tpu_custom_call.1} parent=1 // pred_check
      _
    $region67: #{tpu_custom_call.1} parent=1 // pred_check_branch
      %119 = sbr.rel (0) target = $region69
    $region68: #{tpu_custom_call.1} parent=1 // pred_region
      %120 = dma.done [#allocation3], 256
    $region69: #{tpu_custom_call.1} parent=1 // pred_fallthru
      _
    // Predicated region
    $region70: #{tpu_custom_call.1} parent=1 // pred_check
      _
    $region71: #{tpu_custom_call.1} parent=1 // pred_check_branch
      %122 = sbr.rel (0) target = $region73
    $region72: #{tpu_custom_call.1} parent=1 // pred_region
      %123 = dma.done [#allocation6], 256
    $region73: #{tpu_custom_call.1} parent=1 // pred_fallthru
      _
    // Predicated region
    $region74: #{tpu_custom_call.1} parent=1 // pred_check
      _
    $region75: #{tpu_custom_call.1} parent=1 // pred_check_branch
      %125 = sbr.rel (0) target = $region77
    $region76: #{tpu_custom_call.1} parent=1 // pred_region
      %126 = dma.done [#allocation6], 512
    $region77: #{tpu_custom_call.1} parent=1 // pred_fallthru
      _
    // Predicated region
    $region78: #{tpu_custom_call.1} parent=1 // pred_check
      _
    $region79: #{tpu_custom_call.1} parent=1 // pred_check_branch
      %128 = sbr.rel (0) target = $region81
    $region80: #{tpu_custom_call.1} parent=1 // pred_region
      %129 = dma.done [#allocation9], 512
    $region81: #{tpu_custom_call.1} parent=1 // pred_fallthru
      _
    // Predicated region
    $region82: #{tpu_custom_call.1} parent=1 // pred_check
      _
    $region83: #{tpu_custom_call.1} parent=1 // pred_check_branch
      %131 = sbr.rel (0) target = $region85
    $region84: #{tpu_custom_call.1} parent=1 // pred_region
      %132 = dma.done [#allocation9], 512
    $region85: #{tpu_custom_call.1} parent=1 // pred_fallthru
      _
    // Predicated region
    $region86: #{tpu_custom_call.1} parent=1 // pred_check
      _
    $region87: #{tpu_custom_call.1} parent=1 // pred_check_branch
      %134 = sbr.rel (0) target = $region89
    $region88: #{tpu_custom_call.1} parent=1 // pred_region
      %135 = dma.done [#allocation12], 512
    $region89: #{tpu_custom_call.1} parent=1 // pred_fallthru
      _
    %v136 = vld [vmem:[#allocation2] sm:$0xff]
    %v137 = vld [vmem:[#allocation2 + $0x8] sm:$0xff]
    %v138 = vld [vmem:[%s2] sm:$0xff]
    %v139 = vld [vmem:[%s2 + $0x8] sm:$0xff]
    %v140 = vld [vmem:[%s2 + $0x10] sm:$0xff]
    %v141 = vld [vmem:[%s2 + $0x18] sm:$0xff]
    %v142 = vld [vmem:[%s3] sm:$0xff]
    %v143 = vld [vmem:[%s3 + $0x8] sm:$0xff]
    %v144 = vld [vmem:[%s3 + $0x10] sm:$0xff]
    %v145 = vld [vmem:[%s3 + $0x18] sm:$0xff]
    %v146 = vld [vmem:[%s4] sm:$0x1]
    %v147 = vld [vmem:[%s5] sm:$0x1]
    %v148 = vld [vmem:[%s10] sm:$0x1]
    %v149 = vld [vmem:[%s11] sm:$0x1]
    %v150 = vld [vmem:[%s13] sm:$0x1]
    %v151 = vld [vmem:[%s15] sm:$0x1]
    %vm152 = vcmask 261120
    %v153 = vsel %vm152, %v136, 0.0
    %154 = vadd.xlane.f32.xlu0 %v153
    %v155 = vpop.xlane.xlu0 %154
    %v156 = vsel %vm152, %v137, 0.0
    %157 = vadd.xlane.f32.xlu0 %v156
    %v158 = vpop.xlane.xlu0 %157
    %v159 = vrcp.pop 32.0
    %v160 = vmul.f32 %v155, %v159
    %v161 = vmul.f32 %v158, %v159
    %v162 = vsub.f32 %v136, %v160
    %v163 = vsub.f32 %v137, %v161
    %v164 = vmul.f32 %v162, %v162
    %v165 = vmul.f32 %v163, %v163
    %v166 = vsel %vm152, %v164, 0.0
    %167 = vadd.xlane.f32.xlu0 %v166
    %v168 = vpop.xlane.xlu0 %167
    %v169 = vsel %vm152, %v165, 0.0
    %170 = vadd.xlane.f32.xlu0 %v169
    %v171 = vpop.xlane.xlu0 %170
    %v172 = vrcp.pop 31.0
    %v173 = vmul.f32 %v168, %v172
    %v174 = vmul.f32 %v171, %v172
    %v175 = vrsqrt.pop %v173
    %v176 = vmul.f32 %v173, %v175
    %vm177 = vcmp.eq.f32.partialorder %v173, inf
    %v178 = vsel %vm177, %v173, %v176
    %vm179 = vcmp.eq.f32.partialorder %v173, 0.0
    %v180 = vand.u32 %v173, 2147483648
    %v181 = vsel %vm179, %v180, %v178
    %v182 = vrsqrt.pop %v174
    %v183 = vmul.f32 %v174, %v182
    %vm184 = vcmp.eq.f32.partialorder %v174, inf
    %v185 = vsel %vm184, %v174, %v183
    %vm186 = vcmp.eq.f32.partialorder %v174, 0.0
    %v187 = vand.u32 %v174, 2147483648
    %v188 = vsel %vm186, %v187, %v185
    %v189 = vadd.f32 %v181, 1e-06
    %v190 = vadd.f32 %v188, 1e-06
    %v191 = vrcp.pop %v189
    %v192 = vrcp.pop %v190
    %v194 = vlaneseq
    %v195 = vshrl.u32 %v194, 7
    %v196 = vsub.s32 0, %v195
    %v197 = vrot.slane %v146, %v196
    %v199 = vmul.f32 %v197, %v162
    %v200 = vmul.f32 %v197, %v163
    %v201 = vmul.f32 %v199, %v191
    %v202 = vmul.f32 %v200, %v192
    %v204 = vlaneseq
    %v205 = vshrl.u32 %v204, 7
    %v206 = vsub.s32 0, %v205
    %v207 = vrot.slane %v147, %v206
    %v209 = vadd.f32 %v201, %v207
    %v210 = vadd.f32 %v202, %v207
    %v211 = vld [vmem:[%s6] sm:$0xff]
    %v212 = vld [vmem:[%s6 + $0x8] sm:$0xff]
    %v213 = vld [vmem:[%s6 + $0x10] sm:$0xff]
    %v214 = vld [vmem:[%s6 + $0x18] sm:$0xff]
    %v216 = vsel %vm152, %v209, 0
    %v219 = vsel %vm152, %v210, 0
    %221 = vmatprep.subr.mxu0 0.0
    %222 = vmatpush1.msra.mxu0 %v211
    %223 = vmatprep.subr.mxu0 0.0
    %224 = vmatpush1.msra.mxu0 %v212
    %225 = vmatprep.subr.mxu0 0.0
    %226 = vmatpush1.msra.mxu0 %v213
    %227 = vmatprep.subr.mxu0 0.0
    %228 = vmatpush1.msra.mxu0 %v214
    %229 = vmatprep.subr.mxu0 0.0
    %230 = vmatpush1.msra.mxu0 0.0
    %231 = vmatprep.subr.mxu0 0.0
    %232 = vmatpush1.msra.mxu0 0.0
    %233 = vmatprep.subr.mxu0 0.0
    %234 = vmatpush1.msra.mxu0 0.0
    %235 = vmatprep.subr.mxu0 0.0
    %236 = vmatpush1.msra.mxu0 0.0
    %237 = vmatprep.subr.mxu0 0.0
    %238 = vmatpush1.msra.mxu0 0.0
    %239 = vmatprep.subr.mxu0 0.0
    %240 = vmatpush1.msra.mxu0 0.0
    %241 = vmatprep.subr.mxu0 0.0
    %242 = vmatpush1.msra.mxu0 0.0
    %243 = vmatprep.subr.mxu0 0.0
    %244 = vmatpush1.msra.mxu0 0.0
    %245 = vmatprep.subr.mxu0 0.0
    %246 = vmatpush1.msra.mxu0 0.0
    %247 = vmatprep.subr.mxu0 0.0
    %248 = vmatpush1.msra.mxu0 0.0
    %249 = vmatprep.subr.mxu0 0.0
    %250 = vmatpush1.msra.mxu0 0.0
    %251 = vmatprep.subr.mxu0 0.0
    %252 = vmatpush1.msra.mxu0 0.0
    %253 = vmatprep.subr.mxu0 0.0
    %254 = vmatpush1.msra.mxu0 0.0
    %255 = vmatprep.subr.mxu0 0.0
    %256 = vmatpush1.msra.mxu0 0.0
    %257 = vmatprep.subr.mxu0 0.0
    %258 = vmatpush1.msra.mxu0 0.0
    %259 = vmatprep.subr.mxu0 0.0
    %260 = vmatpush1.msra.mxu0 0.0
    %261 = vmatprep.subr.mxu0 0.0
    %262 = vmatpush1.msra.mxu0 0.0
    %263 = vmatprep.subr.mxu0 0.0
    %264 = vmatpush1.msra.mxu0 0.0
    %265 = vmatprep.subr.mxu0 0.0
    %266 = vmatpush1.msra.mxu0 0.0
    %267 = vmatprep.subr.mxu0 0.0
    %268 = vmatpush1.msra.mxu0 0.0
    %269 = vmatprep.subr.mxu0 0.0
    %270 = vmatpush1.msra.mxu0 0.0
    %271 = vmatprep.subr.mxu0 0.0
    %272 = vmatpush1.msra.mxu0 0.0
    %273 = vmatprep.subr.mxu0 0.0
    %274 = vmatpush1.msra.mxu0 0.0
    %275 = vmatprep.subr.mxu0 0.0
    %276 = vmatpush1.msra.mxu0 0.0
    %277 = vmatprep.subr.mxu0 0.0
    %278 = vmatpush1.msra.mxu0 0.0
    %279 = vmatprep.subr.mxu0 0.0
    %280 = vmatpush1.msra.mxu0 0.0
    %281 = vmatprep.subr.mxu0 0.0
    %282 = vmatpush1.msra.mxu0 0.0
    %283 = vmatprep.subr.mxu0 0.0
    %284 = vmatpush1.msra.mxu0 0.0
    %285 = vmatprep.mubr.f32.mxu0 0.0
    %286 = vmatmul.mubr.f32.gmra.mrb[0].mxu0 %v216
    %v287 = vpop.f32.mrb[0].mxu0
    %v288 = vadd.f32 0.0, %v287
    %v289 = vpop.f32.mrb[0].mxu0
    %290 = vmatprep.mubr.f32.mxu0 0.0
    %291 = vmatmul.mubr.f32.gmra.mrb[0].mxu0 %v219
    %v292 = vpop.f32.mrb[0].mxu0
    %v293 = vadd.f32 0.0, %v292
    %v294 = vpop.f32.mrb[0].mxu0
    %295 = vdwg.mxu0
    %v296 = vmul.f32 %v288, 0.35355338
    %v297 = vmul.f32 %v293, 0.35355338
    %v298 = vld [vmem:[#allocation7] sm:$0xff]
    %v299 = vld [vmem:[#allocation7 + $0x8] sm:$0xff]
    %v300 = vld [vmem:[#allocation7 + $0x10] sm:$0xff]
    %v301 = vld [vmem:[#allocation7 + $0x18] sm:$0xff]
    %302 = vmatprep.subr.mxu0 0.0
    %303 = vmatpush1.msra.mxu0 %v298
    %304 = vmatprep.subr.mxu0 0.0
    %305 = vmatpush1.msra.mxu0 %v299
    %306 = vmatprep.subr.mxu0 0.0
    %307 = vmatpush1.msra.mxu0 %v300
    %308 = vmatprep.subr.mxu0 0.0
    %309 = vmatpush1.msra.mxu0 %v301
    %310 = vmatprep.subr.mxu0 0.0
    %311 = vmatpush1.msra.mxu0 0.0
    %312 = vmatprep.subr.mxu0 0.0
    %313 = vmatpush1.msra.mxu0 0.0
    %314 = vmatprep.subr.mxu0 0.0
    %315 = vmatpush1.msra.mxu0 0.0
    %316 = vmatprep.subr.mxu0 0.0
    %317 = vmatpush1.msra.mxu0 0.0
    %318 = vmatprep.subr.mxu0 0.0
    %319 = vmatpush1.msra.mxu0 0.0
    %320 = vmatprep.subr.mxu0 0.0
    %321 = vmatpush1.msra.mxu0 0.0
    %322 = vmatprep.subr.mxu0 0.0
    %323 = vmatpush1.msra.mxu0 0.0
    %324 = vmatprep.subr.mxu0 0.0
    %325 = vmatpush1.msra.mxu0 0.0
    %326 = vmatprep.subr.mxu0 0.0
    %327 = vmatpush1.msra.mxu0 0.0
    %328 = vmatprep.subr.mxu0 0.0
    %329 = vmatpush1.msra.mxu0 0.0
    %330 = vmatprep.subr.mxu0 0.0
    %331 = vmatpush1.msra.mxu0 0.0
    %332 = vmatprep.subr.mxu0 0.0
    %333 = vmatpush1.msra.mxu0 0.0
    %334 = vmatprep.subr.mxu0 0.0
    %335 = vmatpush1.msra.mxu0 0.0
    %336 = vmatprep.subr.mxu0 0.0
    %337 = vmatpush1.msra.mxu0 0.0
    %338 = vmatprep.subr.mxu0 0.0
    %339 = vmatpush1.msra.mxu0 0.0
    %340 = vmatprep.subr.mxu0 0.0
    %341 = vmatpush1.msra.mxu0 0.0
    %342 = vmatprep.subr.mxu0 0.0
    %343 = vmatpush1.msra.mxu0 0.0
    %344 = vmatprep.subr.mxu0 0.0
    %345 = vmatpush1.msra.mxu0 0.0
    %346 = vmatprep.subr.mxu0 0.0
    %347 = vmatpush1.msra.mxu0 0.0
    %348 = vmatprep.subr.mxu0 0.0
    %349 = vmatpush1.msra.mxu0 0.0
    %350 = vmatprep.subr.mxu0 0.0
    %351 = vmatpush1.msra.mxu0 0.0
    %352 = vmatprep.subr.mxu0 0.0
    %353 = vmatpush1.msra.mxu0 0.0
    %354 = vmatprep.subr.mxu0 0.0
    %355 = vmatpush1.msra.mxu0 0.0
    %356 = vmatprep.subr.mxu0 0.0
    %357 = vmatpush1.msra.mxu0 0.0
    %358 = vmatprep.subr.mxu0 0.0
    %359 = vmatpush1.msra.mxu0 0.0
    %360 = vmatprep.subr.mxu0 0.0
    %361 = vmatpush1.msra.mxu0 0.0
    %362 = vmatprep.subr.mxu0 0.0
    %363 = vmatpush1.msra.mxu0 0.0
    %364 = vmatprep.subr.mxu0 0.0
    %365 = vmatpush1.msra.mxu0 0.0
    %366 = vmatprep.mubr.f32.mxu0 0.0
    %367 = vmatmul.mubr.f32.gmra.mrb[0].mxu0 %v216
    %v368 = vpop.f32.mrb[0].mxu0
    %v369 = vadd.f32 0.0, %v368
    %v370 = vpop.f32.mrb[0].mxu0
    %371 = vmatprep.mubr.f32.mxu0 0.0
    %372 = vmatmul.mubr.f32.gmra.mrb[0].mxu0 %v219
    %v373 = vpop.f32.mrb[0].mxu0
    %v374 = vadd.f32 0.0, %v373
    %v375 = vpop.f32.mrb[0].mxu0
    %376 = vdwg.mxu0
    %v377 = vld [vmem:[#allocation8] sm:$0xff]
    %v378 = vld [vmem:[#allocation8 + $0x8] sm:$0xff]
    %v379 = vld [vmem:[#allocation8 + $0x10] sm:$0xff]
    %v380 = vld [vmem:[#allocation8 + $0x18] sm:$0xff]
    %381 = vmatprep.subr.mxu0 0.0
    %382 = vmatpush1.msra.mxu0 %v377
    %383 = vmatprep.subr.mxu0 0.0
    %384 = vmatpush1.msra.mxu0 %v378
    %385 = vmatprep.subr.mxu0 0.0
    %386 = vmatpush1.msra.mxu0 %v379
    %387 = vmatprep.subr.mxu0 0.0
    %388 = vmatpush1.msra.mxu0 %v380
    %389 = vmatprep.subr.mxu0 0.0
    %390 = vmatpush1.msra.mxu0 0.0
    %391 = vmatprep.subr.mxu0 0.0
    %392 = vmatpush1.msra.mxu0 0.0
    %393 = vmatprep.subr.mxu0 0.0
    %394 = vmatpush1.msra.mxu0 0.0
    %395 = vmatprep.subr.mxu0 0.0
    %396 = vmatpush1.msra.mxu0 0.0
    %397 = vmatprep.subr.mxu0 0.0
    %398 = vmatpush1.msra.mxu0 0.0
    %399 = vmatprep.subr.mxu0 0.0
    %400 = vmatpush1.msra.mxu0 0.0
    %401 = vmatprep.subr.mxu0 0.0
    %402 = vmatpush1.msra.mxu0 0.0
    %403 = vmatprep.subr.mxu0 0.0
    %404 = vmatpush1.msra.mxu0 0.0
    %405 = vmatprep.subr.mxu0 0.0
    %406 = vmatpush1.msra.mxu0 0.0
    %407 = vmatprep.subr.mxu0 0.0
    %408 = vmatpush1.msra.mxu0 0.0
    %409 = vmatprep.subr.mxu0 0.0
    %410 = vmatpush1.msra.mxu0 0.0
    %411 = vmatprep.subr.mxu0 0.0
    %412 = vmatpush1.msra.mxu0 0.0
    %413 = vmatprep.subr.mxu0 0.0
    %414 = vmatpush1.msra.mxu0 0.0
    %415 = vmatprep.subr.mxu0 0.0
    %416 = vmatpush1.msra.mxu0 0.0
    %417 = vmatprep.subr.mxu0 0.0
    %418 = vmatpush1.msra.mxu0 0.0
    %419 = vmatprep.subr.mxu0 0.0
    %420 = vmatpush1.msra.mxu0 0.0
    %421 = vmatprep.subr.mxu0 0.0
    %422 = vmatpush1.msra.mxu0 0.0
    %423 = vmatprep.subr.mxu0 0.0
    %424 = vmatpush1.msra.mxu0 0.0
    %425 = vmatprep.subr.mxu0 0.0
    %426 = vmatpush1.msra.mxu0 0.0
    %427 = vmatprep.subr.mxu0 0.0
    %428 = vmatpush1.msra.mxu0 0.0
    %429 = vmatprep.subr.mxu0 0.0
    %430 = vmatpush1.msra.mxu0 0.0
    %431 = vmatprep.subr.mxu0 0.0
    %432 = vmatpush1.msra.mxu0 0.0
    %433 = vmatprep.subr.mxu0 0.0
    %434 = vmatpush1.msra.mxu0 0.0
    %435 = vmatprep.subr.mxu0 0.0
    %436 = vmatpush1.msra.mxu0 0.0
    %437 = vmatprep.subr.mxu0 0.0
    %438 = vmatpush1.msra.mxu0 0.0
    %439 = vmatprep.subr.mxu0 0.0
    %440 = vmatpush1.msra.mxu0 0.0
    %441 = vmatprep.subr.mxu0 0.0
    %442 = vmatpush1.msra.mxu0 0.0
    %443 = vmatprep.subr.mxu0 0.0
    %444 = vmatpush1.msra.mxu0 0.0
    %445 = vmatprep.mubr.f32.mxu0 0.0
    %446 = vmatmul.mubr.f32.gmra.mrb[0].mxu0 %v216
    %v447 = vpop.f32.mrb[0].mxu0
    %v448 = vadd.f32 0.0, %v447
    %v449 = vpop.f32.mrb[0].mxu0
    %450 = vmatprep.mubr.f32.mxu0 0.0
    %451 = vmatmul.mubr.f32.gmra.mrb[0].mxu0 %v219
    %v452 = vpop.f32.mrb[0].mxu0
    %v453 = vadd.f32 0.0, %v452
    %v454 = vpop.f32.mrb[0].mxu0
    %455 = vdwg.mxu0
    %v456 = vld [vmem:[#allocation5] sm:$0xff]
    %v457 = vmul.f32 %v369, %v138
    %v458 = vmul.f32 %v369, %v139
    %v459 = vmul.f32 %v369, %v140
    %v460 = vmul.f32 %v369, %v141
    %v461 = vmul.f32 %v448, %v138
    %v462 = vmul.f32 %v448, %v139
    %v463 = vmul.f32 %v448, %v140
    %v464 = vmul.f32 %v448, %v141
    %v466 = vsel %vm152, %v296, 0
    %v469 = vsel %vm152, %v457, 0
    %v472 = vsel %vm152, %v458, 0
    %v475 = vsel %vm152, %v459, 0
    %v478 = vsel %vm152, %v460, 0
    %480 = vmatprep.subr.mxu0 0.0
    %481 = vmatpush1.xpose.msra.mxu0 %v469
    %482 = vmatprep.subr.mxu0 0.0
    %483 = vmatpush1.xpose.msra.mxu0 %v472
    %484 = vmatprep.subr.mxu0 0.0
    %485 = vmatpush1.xpose.msra.mxu0 %v475
    %486 = vmatprep.subr.mxu0 0.0
    %487 = vmatpush1.xpose.msra.mxu0 %v478
    %488 = vmatprep.subr.mxu0 0.0
    %489 = vmatpush1.xpose.msra.mxu0 0.0
    %490 = vmatprep.subr.mxu0 0.0
    %491 = vmatpush1.xpose.msra.mxu0 0.0
    %492 = vmatprep.subr.mxu0 0.0
    %493 = vmatpush1.xpose.msra.mxu0 0.0
    %494 = vmatprep.subr.mxu0 0.0
    %495 = vmatpush1.xpose.msra.mxu0 0.0
    %496 = vmatprep.subr.mxu0 0.0
    %497 = vmatpush1.xpose.msra.mxu0 0.0
    %498 = vmatprep.subr.mxu0 0.0
    %499 = vmatpush1.xpose.msra.mxu0 0.0
    %500 = vmatprep.subr.mxu0 0.0
    %501 = vmatpush1.xpose.msra.mxu0 0.0
    %502 = vmatprep.subr.mxu0 0.0
    %503 = vmatpush1.xpose.msra.mxu0 0.0
    %504 = vmatprep.subr.mxu0 0.0
    %505 = vmatpush1.xpose.msra.mxu0 0.0
    %506 = vmatprep.subr.mxu0 0.0
    %507 = vmatpush1.xpose.msra.mxu0 0.0
    %508 = vmatprep.subr.mxu0 0.0
    %509 = vmatpush1.xpose.msra.mxu0 0.0
    %510 = vmatprep.subr.mxu0 0.0
    %511 = vmatpush1.xpose.msra.mxu0 0.0
    %512 = vmatprep.subr.mxu0 0.0
    %513 = vmatpush1.xpose.msra.mxu0 0.0
    %514 = vmatprep.subr.mxu0 0.0
    %515 = vmatpush1.xpose.msra.mxu0 0.0
    %516 = vmatprep.subr.mxu0 0.0
    %517 = vmatpush1.xpose.msra.mxu0 0.0
    %518 = vmatprep.subr.mxu0 0.0
    %519 = vmatpush1.xpose.msra.mxu0 0.0
    %520 = vmatprep.subr.mxu0 0.0
    %521 = vmatpush1.xpose.msra.mxu0 0.0
    %522 = vmatprep.subr.mxu0 0.0
    %523 = vmatpush1.xpose.msra.mxu0 0.0
    %524 = vmatprep.subr.mxu0 0.0
    %525 = vmatpush1.xpose.msra.mxu0 0.0
    %526 = vmatprep.subr.mxu0 0.0
    %527 = vmatpush1.xpose.msra.mxu0 0.0
    %528 = vmatprep.subr.mxu0 0.0
    %529 = vmatpush1.xpose.msra.mxu0 0.0
    %530 = vmatprep.subr.mxu0 0.0
    %531 = vmatpush1.xpose.msra.mxu0 0.0
    %532 = vmatprep.subr.mxu0 0.0
    %533 = vmatpush1.xpose.msra.mxu0 0.0
    %534 = vmatprep.subr.mxu0 0.0
    %535 = vmatpush1.xpose.msra.mxu0 0.0
    %536 = vmatprep.subr.mxu0 0.0
    %537 = vmatpush1.xpose.msra.mxu0 0.0
    %538 = vmatprep.subr.mxu0 0.0
    %539 = vmatpush1.xpose.msra.mxu0 0.0
    %540 = vmatprep.subr.mxu0 0.0
    %541 = vmatpush1.xpose.msra.mxu0 0.0
    %542 = vmatprep.subr.mxu0 0.0
    %543 = vmatpush1.xpose.msra.mxu0 0.0
    %544 = vmatprep.mubr.f32.mxu0 0.0
    %545 = vmatmul.mubr.f32.gmra.mrb[0].mxu0 %v466
    %v546 = vpop.f32.mrb[0].mxu0
    %v547 = vadd.f32 0.0, %v546
    %v548 = vpop.f32.mrb[0].mxu0
    %549 = vdwg.mxu0
    %vm550 = vcmp.eq.s32.totalorder %v456, 0
    %v551 = vsel %vm550, -1e+09, %v547
    %v552 = vsel %vm152, %v551, -inf
    %553 = vmax.xlane.f32.xlu0 %v552
    %v554 = vpop.xlane.xlu0 %553
    %v555 = vsub.f32 %v551, %v554
    %v556 = vmul.f32 %v555, 1.442695
    %v557 = vpow.pop %v556
    %v559 = vsel %vm152, %v557, 0
    %561 = vmatprep.subr.mxu0 0.0
    %562 = vmatpush1.msra.mxu0 %v142
    %563 = vmatprep.subr.mxu0 0.0
    %564 = vmatpush1.msra.mxu0 %v143
    %565 = vmatprep.subr.mxu0 0.0
    %566 = vmatpush1.msra.mxu0 %v144
    %567 = vmatprep.subr.mxu0 0.0
    %568 = vmatpush1.msra.mxu0 %v145
    %569 = vmatprep.subr.mxu0 0.0
    %570 = vmatpush1.msra.mxu0 0.0
    %571 = vmatprep.subr.mxu0 0.0
    %572 = vmatpush1.msra.mxu0 0.0
    %573 = vmatprep.subr.mxu0 0.0
    %574 = vmatpush1.msra.mxu0 0.0
    %575 = vmatprep.subr.mxu0 0.0
    %576 = vmatpush1.msra.mxu0 0.0
    %577 = vmatprep.subr.mxu0 0.0
    %578 = vmatpush1.msra.mxu0 0.0
    %579 = vmatprep.subr.mxu0 0.0
    %580 = vmatpush1.msra.mxu0 0.0
    %581 = vmatprep.subr.mxu0 0.0
    %582 = vmatpush1.msra.mxu0 0.0
    %583 = vmatprep.subr.mxu0 0.0
    %584 = vmatpush1.msra.mxu0 0.0
    %585 = vmatprep.subr.mxu0 0.0
    %586 = vmatpush1.msra.mxu0 0.0
    %587 = vmatprep.subr.mxu0 0.0
    %588 = vmatpush1.msra.mxu0 0.0
    %589 = vmatprep.subr.mxu0 0.0
    %590 = vmatpush1.msra.mxu0 0.0
    %591 = vmatprep.subr.mxu0 0.0
    %592 = vmatpush1.msra.mxu0 0.0
    %593 = vmatprep.subr.mxu0 0.0
    %594 = vmatpush1.msra.mxu0 0.0
    %595 = vmatprep.subr.mxu0 0.0
    %596 = vmatpush1.msra.mxu0 0.0
    %597 = vmatprep.subr.mxu0 0.0
    %598 = vmatpush1.msra.mxu0 0.0
    %599 = vmatprep.subr.mxu0 0.0
    %600 = vmatpush1.msra.mxu0 0.0
    %601 = vmatprep.subr.mxu0 0.0
    %602 = vmatpush1.msra.mxu0 0.0
    %603 = vmatprep.subr.mxu0 0.0
    %604 = vmatpush1.msra.mxu0 0.0
    %605 = vmatprep.subr.mxu0 0.0
    %606 = vmatpush1.msra.mxu0 0.0
    %607 = vmatprep.subr.mxu0 0.0
    %608 = vmatpush1.msra.mxu0 0.0
    %609 = vmatprep.subr.mxu0 0.0
    %610 = vmatpush1.msra.mxu0 0.0
    %611 = vmatprep.subr.mxu0 0.0
    %612 = vmatpush1.msra.mxu0 0.0
    %613 = vmatprep.subr.mxu0 0.0
    %614 = vmatpush1.msra.mxu0 0.0
    %615 = vmatprep.subr.mxu0 0.0
    %616 = vmatpush1.msra.mxu0 0.0
    %617 = vmatprep.subr.mxu0 0.0
    %618 = vmatpush1.msra.mxu0 0.0
    %619 = vmatprep.subr.mxu0 0.0
    %620 = vmatpush1.msra.mxu0 0.0
    %621 = vmatprep.subr.mxu0 0.0
    %622 = vmatpush1.msra.mxu0 0.0
    %623 = vmatprep.subr.mxu0 0.0
    %624 = vmatpush1.msra.mxu0 0.0
    %625 = vmatprep.mubr.f32.mxu0 0.0
    %626 = vmatmul.mubr.f32.gmra.mrb[0].mxu0 %v559
    %v627 = vpop.f32.mrb[0].mxu0
    %v628 = vadd.f32 0.0, %v627
    %v629 = vpop.f32.mrb[0].mxu0
    %630 = vdwg.mxu0
    %v631 = vrcp.pop %v628
    %v632 = vmul.f32 %v557, %v631
    %v634 = vsel %vm152, %v632, 0
    %636 = vmatprep.subr.mxu0 0.0
    %637 = vmatpush1.msra.mxu0 %v461
    %638 = vmatprep.subr.mxu0 0.0
    %639 = vmatpush1.msra.mxu0 %v462
    %640 = vmatprep.subr.mxu0 0.0
    %641 = vmatpush1.msra.mxu0 %v463
    %642 = vmatprep.subr.mxu0 0.0
    %643 = vmatpush1.msra.mxu0 %v464
    %644 = vmatprep.subr.mxu0 0.0
    %645 = vmatpush1.msra.mxu0 0.0
    %646 = vmatprep.subr.mxu0 0.0
    %647 = vmatpush1.msra.mxu0 0.0
    %648 = vmatprep.subr.mxu0 0.0
    %649 = vmatpush1.msra.mxu0 0.0
    %650 = vmatprep.subr.mxu0 0.0
    %651 = vmatpush1.msra.mxu0 0.0
    %652 = vmatprep.subr.mxu0 0.0
    %653 = vmatpush1.msra.mxu0 0.0
    %654 = vmatprep.subr.mxu0 0.0
    %655 = vmatpush1.msra.mxu0 0.0
    %656 = vmatprep.subr.mxu0 0.0
    %657 = vmatpush1.msra.mxu0 0.0
    %658 = vmatprep.subr.mxu0 0.0
    %659 = vmatpush1.msra.mxu0 0.0
    %660 = vmatprep.subr.mxu0 0.0
    %661 = vmatpush1.msra.mxu0 0.0
    %662 = vmatprep.subr.mxu0 0.0
    %663 = vmatpush1.msra.mxu0 0.0
    %664 = vmatprep.subr.mxu0 0.0
    %665 = vmatpush1.msra.mxu0 0.0
    %666 = vmatprep.subr.mxu0 0.0
    %667 = vmatpush1.msra.mxu0 0.0
    %668 = vmatprep.subr.mxu0 0.0
    %669 = vmatpush1.msra.mxu0 0.0
    %670 = vmatprep.subr.mxu0 0.0
    %671 = vmatpush1.msra.mxu0 0.0
    %672 = vmatprep.subr.mxu0 0.0
    %673 = vmatpush1.msra.mxu0 0.0
    %674 = vmatprep.subr.mxu0 0.0
    %675 = vmatpush1.msra.mxu0 0.0
    %676 = vmatprep.subr.mxu0 0.0
    %677 = vmatpush1.msra.mxu0 0.0
    %678 = vmatprep.subr.mxu0 0.0
    %679 = vmatpush1.msra.mxu0 0.0
    %680 = vmatprep.subr.mxu0 0.0
    %681 = vmatpush1.msra.mxu0 0.0
    %682 = vmatprep.subr.mxu0 0.0
    %683 = vmatpush1.msra.mxu0 0.0
    %684 = vmatprep.subr.mxu0 0.0
    %685 = vmatpush1.msra.mxu0 0.0
    %686 = vmatprep.subr.mxu0 0.0
    %687 = vmatpush1.msra.mxu0 0.0
    %688 = vmatprep.subr.mxu0 0.0
    %689 = vmatpush1.msra.mxu0 0.0
    %690 = vmatprep.subr.mxu0 0.0
    %691 = vmatpush1.msra.mxu0 0.0
    %692 = vmatprep.subr.mxu0 0.0
    %693 = vmatpush1.msra.mxu0 0.0
    %694 = vmatprep.subr.mxu0 0.0
    %695 = vmatpush1.msra.mxu0 0.0
    %696 = vmatprep.subr.mxu0 0.0
    %697 = vmatpush1.msra.mxu0 0.0
    %698 = vmatprep.subr.mxu0 0.0
    %699 = vmatpush1.msra.mxu0 0.0
    %700 = vmatprep.mubr.f32.mxu0 0.0
    %701 = vmatmul.mubr.f32.gmra.mrb[0].mxu0 %v634
    %v702 = vpop.f32.mrb[0].mxu0
    %v703 = vadd.f32 0.0, %v702
    %v704 = vpop.f32.mrb[0].mxu0
    %705 = vdwg.mxu0
    %s706 = scalar_lea.vmem [#allocation5], 8
    %v707 = vld [vmem:[%s706] sm:$0xff]
    %v708 = vmul.f32 %v374, %v138
    %v709 = vmul.f32 %v374, %v139
    %v710 = vmul.f32 %v374, %v140
    %v711 = vmul.f32 %v374, %v141
    %v712 = vmul.f32 %v453, %v138
    %v713 = vmul.f32 %v453, %v139
    %v714 = vmul.f32 %v453, %v140
    %v715 = vmul.f32 %v453, %v141
    %v717 = vsel %vm152, %v297, 0
    %v720 = vsel %vm152, %v708, 0
    %v723 = vsel %vm152, %v709, 0
    %v726 = vsel %vm152, %v710, 0
    %v729 = vsel %vm152, %v711, 0
    %731 = vmatprep.subr.mxu0 0.0
    %732 = vmatpush1.xpose.msra.mxu0 %v720
    %733 = vmatprep.subr.mxu0 0.0
    %734 = vmatpush1.xpose.msra.mxu0 %v723
    %735 = vmatprep.subr.mxu0 0.0
    %736 = vmatpush1.xpose.msra.mxu0 %v726
    %737 = vmatprep.subr.mxu0 0.0
    %738 = vmatpush1.xpose.msra.mxu0 %v729
    %739 = vmatprep.subr.mxu0 0.0
    %740 = vmatpush1.xpose.msra.mxu0 0.0
    %741 = vmatprep.subr.mxu0 0.0
    %742 = vmatpush1.xpose.msra.mxu0 0.0
    %743 = vmatprep.subr.mxu0 0.0
    %744 = vmatpush1.xpose.msra.mxu0 0.0
    %745 = vmatprep.subr.mxu0 0.0
    %746 = vmatpush1.xpose.msra.mxu0 0.0
    %747 = vmatprep.subr.mxu0 0.0
    %748 = vmatpush1.xpose.msra.mxu0 0.0
    %749 = vmatprep.subr.mxu0 0.0
    %750 = vmatpush1.xpose.msra.mxu0 0.0
    %751 = vmatprep.subr.mxu0 0.0
    %752 = vmatpush1.xpose.msra.mxu0 0.0
    %753 = vmatprep.subr.mxu0 0.0
    %754 = vmatpush1.xpose.msra.mxu0 0.0
    %755 = vmatprep.subr.mxu0 0.0
    %756 = vmatpush1.xpose.msra.mxu0 0.0
    %757 = vmatprep.subr.mxu0 0.0
    %758 = vmatpush1.xpose.msra.mxu0 0.0
    %759 = vmatprep.subr.mxu0 0.0
    %760 = vmatpush1.xpose.msra.mxu0 0.0
    %761 = vmatprep.subr.mxu0 0.0
    %762 = vmatpush1.xpose.msra.mxu0 0.0
    %763 = vmatprep.subr.mxu0 0.0
    %764 = vmatpush1.xpose.msra.mxu0 0.0
    %765 = vmatprep.subr.mxu0 0.0
    %766 = vmatpush1.xpose.msra.mxu0 0.0
    %767 = vmatprep.subr.mxu0 0.0
    %768 = vmatpush1.xpose.msra.mxu0 0.0
    %769 = vmatprep.subr.mxu0 0.0
    %770 = vmatpush1.xpose.msra.mxu0 0.0
    %771 = vmatprep.subr.mxu0 0.0
    %772 = vmatpush1.xpose.msra.mxu0 0.0
    %773 = vmatprep.subr.mxu0 0.0
    %774 = vmatpush1.xpose.msra.mxu0 0.0
    %775 = vmatprep.subr.mxu0 0.0
    %776 = vmatpush1.xpose.msra.mxu0 0.0
    %777 = vmatprep.subr.mxu0 0.0
    %778 = vmatpush1.xpose.msra.mxu0 0.0
    %779 = vmatprep.subr.mxu0 0.0
    %780 = vmatpush1.xpose.msra.mxu0 0.0
    %781 = vmatprep.subr.mxu0 0.0
    %782 = vmatpush1.xpose.msra.mxu0 0.0
    %783 = vmatprep.subr.mxu0 0.0
    %784 = vmatpush1.xpose.msra.mxu0 0.0
    %785 = vmatprep.subr.mxu0 0.0
    %786 = vmatpush1.xpose.msra.mxu0 0.0
    %787 = vmatprep.subr.mxu0 0.0
    %788 = vmatpush1.xpose.msra.mxu0 0.0
    %789 = vmatprep.subr.mxu0 0.0
    %790 = vmatpush1.xpose.msra.mxu0 0.0
    %791 = vmatprep.subr.mxu0 0.0
    %792 = vmatpush1.xpose.msra.mxu0 0.0
    %793 = vmatprep.subr.mxu0 0.0
    %794 = vmatpush1.xpose.msra.mxu0 0.0
    %795 = vmatprep.mubr.f32.mxu0 0.0
    %796 = vmatmul.mubr.f32.gmra.mrb[0].mxu0 %v717
    %v797 = vpop.f32.mrb[0].mxu0
    %v798 = vadd.f32 0.0, %v797
    %v799 = vpop.f32.mrb[0].mxu0
    %800 = vdwg.mxu0
    %vm801 = vcmp.eq.s32.totalorder %v707, 0
    %v802 = vsel %vm801, -1e+09, %v798
    %v803 = vsel %vm152, %v802, -inf
    %804 = vmax.xlane.f32.xlu0 %v803
    %v805 = vpop.xlane.xlu0 %804
    %v806 = vsub.f32 %v802, %v805
    %v807 = vmul.f32 %v806, 1.442695
    %v808 = vpow.pop %v807
    %v810 = vsel %vm152, %v808, 0
    %812 = vmatprep.subr.mxu0 0.0
    %813 = vmatpush1.msra.mxu0 %v142
    %814 = vmatprep.subr.mxu0 0.0
    %815 = vmatpush1.msra.mxu0 %v143
    %816 = vmatprep.subr.mxu0 0.0
    %817 = vmatpush1.msra.mxu0 %v144
    %818 = vmatprep.subr.mxu0 0.0
    %819 = vmatpush1.msra.mxu0 %v145
    %820 = vmatprep.subr.mxu0 0.0
    %821 = vmatpush1.msra.mxu0 0.0
    %822 = vmatprep.subr.mxu0 0.0
    %823 = vmatpush1.msra.mxu0 0.0
    %824 = vmatprep.subr.mxu0 0.0
    %825 = vmatpush1.msra.mxu0 0.0
    %826 = vmatprep.subr.mxu0 0.0
    %827 = vmatpush1.msra.mxu0 0.0
    %828 = vmatprep.subr.mxu0 0.0
    %829 = vmatpush1.msra.mxu0 0.0
    %830 = vmatprep.subr.mxu0 0.0
    %831 = vmatpush1.msra.mxu0 0.0
    %832 = vmatprep.subr.mxu0 0.0
    %833 = vmatpush1.msra.mxu0 0.0
    %834 = vmatprep.subr.mxu0 0.0
    %835 = vmatpush1.msra.mxu0 0.0
    %836 = vmatprep.subr.mxu0 0.0
    %837 = vmatpush1.msra.mxu0 0.0
    %838 = vmatprep.subr.mxu0 0.0
    %839 = vmatpush1.msra.mxu0 0.0
    %840 = vmatprep.subr.mxu0 0.0
    %841 = vmatpush1.msra.mxu0 0.0
    %842 = vmatprep.subr.mxu0 0.0
    %843 = vmatpush1.msra.mxu0 0.0
    %844 = vmatprep.subr.mxu0 0.0
    %845 = vmatpush1.msra.mxu0 0.0
    %846 = vmatprep.subr.mxu0 0.0
    %847 = vmatpush1.msra.mxu0 0.0
    %848 = vmatprep.subr.mxu0 0.0
    %849 = vmatpush1.msra.mxu0 0.0
    %850 = vmatprep.subr.mxu0 0.0
    %851 = vmatpush1.msra.mxu0 0.0
    %852 = vmatprep.subr.mxu0 0.0
    %853 = vmatpush1.msra.mxu0 0.0
    %854 = vmatprep.subr.mxu0 0.0
    %855 = vmatpush1.msra.mxu0 0.0
    %856 = vmatprep.subr.mxu0 0.0
    %857 = vmatpush1.msra.mxu0 0.0
    %858 = vmatprep.subr.mxu0 0.0
    %859 = vmatpush1.msra.mxu0 0.0
    %860 = vmatprep.subr.mxu0 0.0
    %861 = vmatpush1.msra.mxu0 0.0
    %862 = vmatprep.subr.mxu0 0.0
    %863 = vmatpush1.msra.mxu0 0.0
    %864 = vmatprep.subr.mxu0 0.0
    %865 = vmatpush1.msra.mxu0 0.0
    %866 = vmatprep.subr.mxu0 0.0
    %867 = vmatpush1.msra.mxu0 0.0
    %868 = vmatprep.subr.mxu0 0.0
    %869 = vmatpush1.msra.mxu0 0.0
    %870 = vmatprep.subr.mxu0 0.0
    %871 = vmatpush1.msra.mxu0 0.0
    %872 = vmatprep.subr.mxu0 0.0
    %873 = vmatpush1.msra.mxu0 0.0
    %874 = vmatprep.subr.mxu0 0.0
    %875 = vmatpush1.msra.mxu0 0.0
    %876 = vmatprep.mubr.f32.mxu0 0.0
    %877 = vmatmul.mubr.f32.gmra.mrb[0].mxu0 %v810
    %v878 = vpop.f32.mrb[0].mxu0
    %v879 = vadd.f32 0.0, %v878
    %v880 = vpop.f32.mrb[0].mxu0
    %881 = vdwg.mxu0
    %v882 = vrcp.pop %v879
    %v883 = vmul.f32 %v808, %v882
    %v885 = vsel %vm152, %v883, 0
    %887 = vmatprep.subr.mxu0 0.0
    %888 = vmatpush1.msra.mxu0 %v712
    %889 = vmatprep.subr.mxu0 0.0
    %890 = vmatpush1.msra.mxu0 %v713
    %891 = vmatprep.subr.mxu0 0.0
    %892 = vmatpush1.msra.mxu0 %v714
    %893 = vmatprep.subr.mxu0 0.0
    %894 = vmatpush1.msra.mxu0 %v715
    %895 = vmatprep.subr.mxu0 0.0
    %896 = vmatpush1.msra.mxu0 0.0
    %897 = vmatprep.subr.mxu0 0.0
    %898 = vmatpush1.msra.mxu0 0.0
    %899 = vmatprep.subr.mxu0 0.0
    %900 = vmatpush1.msra.mxu0 0.0
    %901 = vmatprep.subr.mxu0 0.0
    %902 = vmatpush1.msra.mxu0 0.0
    %903 = vmatprep.subr.mxu0 0.0
    %904 = vmatpush1.msra.mxu0 0.0
    %905 = vmatprep.subr.mxu0 0.0
    %906 = vmatpush1.msra.mxu0 0.0
    %907 = vmatprep.subr.mxu0 0.0
    %908 = vmatpush1.msra.mxu0 0.0
    %909 = vmatprep.subr.mxu0 0.0
    %910 = vmatpush1.msra.mxu0 0.0
    %911 = vmatprep.subr.mxu0 0.0
    %912 = vmatpush1.msra.mxu0 0.0
    %913 = vmatprep.subr.mxu0 0.0
    %914 = vmatpush1.msra.mxu0 0.0
    %915 = vmatprep.subr.mxu0 0.0
    %916 = vmatpush1.msra.mxu0 0.0
    %917 = vmatprep.subr.mxu0 0.0
    %918 = vmatpush1.msra.mxu0 0.0
    %919 = vmatprep.subr.mxu0 0.0
    %920 = vmatpush1.msra.mxu0 0.0
    %921 = vmatprep.subr.mxu0 0.0
    %922 = vmatpush1.msra.mxu0 0.0
    %923 = vmatprep.subr.mxu0 0.0
    %924 = vmatpush1.msra.mxu0 0.0
    %925 = vmatprep.subr.mxu0 0.0
    %926 = vmatpush1.msra.mxu0 0.0
    %927 = vmatprep.subr.mxu0 0.0
    %928 = vmatpush1.msra.mxu0 0.0
    %929 = vmatprep.subr.mxu0 0.0
    %930 = vmatpush1.msra.mxu0 0.0
    %931 = vmatprep.subr.mxu0 0.0
    %932 = vmatpush1.msra.mxu0 0.0
    %933 = vmatprep.subr.mxu0 0.0
    %934 = vmatpush1.msra.mxu0 0.0
    %935 = vmatprep.subr.mxu0 0.0
    %936 = vmatpush1.msra.mxu0 0.0
    %937 = vmatprep.subr.mxu0 0.0
    %938 = vmatpush1.msra.mxu0 0.0
    %939 = vmatprep.subr.mxu0 0.0
    %940 = vmatpush1.msra.mxu0 0.0
    %941 = vmatprep.subr.mxu0 0.0
    %942 = vmatpush1.msra.mxu0 0.0
    %943 = vmatprep.subr.mxu0 0.0
    %944 = vmatpush1.msra.mxu0 0.0
    %945 = vmatprep.subr.mxu0 0.0
    %946 = vmatpush1.msra.mxu0 0.0
    %947 = vmatprep.subr.mxu0 0.0
    %948 = vmatpush1.msra.mxu0 0.0
    %949 = vmatprep.subr.mxu0 0.0
    %950 = vmatpush1.msra.mxu0 0.0
    %951 = vmatprep.mubr.f32.mxu0 0.0
    %952 = vmatmul.mubr.f32.gmra.mrb[0].mxu0 %v885
    %v953 = vpop.f32.mrb[0].mxu0
    %v954 = vadd.f32 0.0, %v953
    %v955 = vpop.f32.mrb[0].mxu0
    %956 = vdwg.mxu0
    %v957 = vld [vmem:[#allocation10] sm:$0xff]
    %v958 = vld [vmem:[#allocation10 + $0x8] sm:$0xff]
    %v959 = vld [vmem:[#allocation10 + $0x10] sm:$0xff]
    %v960 = vld [vmem:[#allocation10 + $0x18] sm:$0xff]
    %v962 = vsel %vm152, %v703, 0
    %v965 = vsel %vm152, %v954, 0
    %967 = vmatprep.subr.mxu0 0.0
    %968 = vmatpush1.msra.mxu0 %v957
    %969 = vmatprep.subr.mxu0 0.0
    %970 = vmatpush1.msra.mxu0 %v958
    %971 = vmatprep.subr.mxu0 0.0
    %972 = vmatpush1.msra.mxu0 %v959
    %973 = vmatprep.subr.mxu0 0.0
    %974 = vmatpush1.msra.mxu0 %v960
    %975 = vmatprep.subr.mxu0 0.0
    %976 = vmatpush1.msra.mxu0 0.0
    %977 = vmatprep.subr.mxu0 0.0
    %978 = vmatpush1.msra.mxu0 0.0
    %979 = vmatprep.subr.mxu0 0.0
    %980 = vmatpush1.msra.mxu0 0.0
    %981 = vmatprep.subr.mxu0 0.0
    %982 = vmatpush1.msra.mxu0 0.0
    %983 = vmatprep.subr.mxu0 0.0
    %984 = vmatpush1.msra.mxu0 0.0
    %985 = vmatprep.subr.mxu0 0.0
    %986 = vmatpush1.msra.mxu0 0.0
    %987 = vmatprep.subr.mxu0 0.0
    %988 = vmatpush1.msra.mxu0 0.0
    %989 = vmatprep.subr.mxu0 0.0
    %990 = vmatpush1.msra.mxu0 0.0
    %991 = vmatprep.subr.mxu0 0.0
    %992 = vmatpush1.msra.mxu0 0.0
    %993 = vmatprep.subr.mxu0 0.0
    %994 = vmatpush1.msra.mxu0 0.0
    %995 = vmatprep.subr.mxu0 0.0
    %996 = vmatpush1.msra.mxu0 0.0
    %997 = vmatprep.subr.mxu0 0.0
    %998 = vmatpush1.msra.mxu0 0.0
    %999 = vmatprep.subr.mxu0 0.0
    %1000 = vmatpush1.msra.mxu0 0.0
    %1001 = vmatprep.subr.mxu0 0.0
    %1002 = vmatpush1.msra.mxu0 0.0
    %1003 = vmatprep.subr.mxu0 0.0
    %1004 = vmatpush1.msra.mxu0 0.0
    %1005 = vmatprep.subr.mxu0 0.0
    %1006 = vmatpush1.msra.mxu0 0.0
    %1007 = vmatprep.subr.mxu0 0.0
    %1008 = vmatpush1.msra.mxu0 0.0
    %1009 = vmatprep.subr.mxu0 0.0
    %1010 = vmatpush1.msra.mxu0 0.0
    %1011 = vmatprep.subr.mxu0 0.0
    %1012 = vmatpush1.msra.mxu0 0.0
    %1013 = vmatprep.subr.mxu0 0.0
    %1014 = vmatpush1.msra.mxu0 0.0
    %1015 = vmatprep.subr.mxu0 0.0
    %1016 = vmatpush1.msra.mxu0 0.0
    %1017 = vmatprep.subr.mxu0 0.0
    %1018 = vmatpush1.msra.mxu0 0.0
    %1019 = vmatprep.subr.mxu0 0.0
    %1020 = vmatpush1.msra.mxu0 0.0
    %1021 = vmatprep.subr.mxu0 0.0
    %1022 = vmatpush1.msra.mxu0 0.0
    %1023 = vmatprep.subr.mxu0 0.0
    %1024 = vmatpush1.msra.mxu0 0.0
    %1025 = vmatprep.subr.mxu0 0.0
    %1026 = vmatpush1.msra.mxu0 0.0
    %1027 = vmatprep.subr.mxu0 0.0
    %1028 = vmatpush1.msra.mxu0 0.0
    %1029 = vmatprep.subr.mxu0 0.0
    %1030 = vmatpush1.msra.mxu0 0.0
    %1031 = vmatprep.mubr.f32.mxu0 0.0
    %1032 = vmatmul.mubr.f32.gmra.mrb[0].mxu0 %v962
    %v1033 = vpop.f32.mrb[0].mxu0
    %v1034 = vadd.f32 0.0, %v1033
    %v1035 = vpop.f32.mrb[0].mxu0
    %1036 = vmatprep.mubr.f32.mxu0 0.0
    %1037 = vmatmul.mubr.f32.gmra.mrb[0].mxu0 %v965
    %v1038 = vpop.f32.mrb[0].mxu0
    %v1039 = vadd.f32 0.0, %v1038
    %v1040 = vpop.f32.mrb[0].mxu0
    %1041 = vdwg.mxu0
    %v1042 = vadd.f32 %v136, %v1034
    %v1043 = vadd.f32 %v137, %v1039
    %v1044 = vsel %vm152, %v1042, 0.0
    %1045 = vadd.xlane.f32.xlu0 %v1044
    %v1046 = vpop.xlane.xlu0 %1045
    %v1047 = vsel %vm152, %v1043, 0.0
    %1048 = vadd.xlane.f32.xlu0 %v1047
    %v1049 = vpop.xlane.xlu0 %1048
    %v1050 = vmul.f32 %v1046, %v159
    %v1051 = vmul.f32 %v1049, %v159
    %v1052 = vsub.f32 %v1042, %v1050
    %v1053 = vsub.f32 %v1043, %v1051
    %v1054 = vmul.f32 %v1052, %v1052
    %v1055 = vmul.f32 %v1053, %v1053
    %v1056 = vsel %vm152, %v1054, 0.0
    %1057 = vadd.xlane.f32.xlu0 %v1056
    %v1058 = vpop.xlane.xlu0 %1057
    %v1059 = vsel %vm152, %v1055, 0.0
    %1060 = vadd.xlane.f32.xlu0 %v1059
    %v1061 = vpop.xlane.xlu0 %1060
    %v1062 = vmul.f32 %v1058, %v172
    %v1063 = vmul.f32 %v1061, %v172
    %v1064 = vrsqrt.pop %v1062
    %v1065 = vmul.f32 %v1062, %v1064
    %vm1066 = vcmp.eq.f32.partialorder %v1062, inf
    %v1067 = vsel %vm1066, %v1062, %v1065
    %vm1068 = vcmp.eq.f32.partialorder %v1062, 0.0
    %v1069 = vand.u32 %v1062, 2147483648
    %v1070 = vsel %vm1068, %v1069, %v1067
    %v1071 = vrsqrt.pop %v1063
    %v1072 = vmul.f32 %v1063, %v1071
    %vm1073 = vcmp.eq.f32.partialorder %v1063, inf
    %v1074 = vsel %vm1073, %v1063, %v1072
    %vm1075 = vcmp.eq.f32.partialorder %v1063, 0.0
    %v1076 = vand.u32 %v1063, 2147483648
    %v1077 = vsel %vm1075, %v1076, %v1074
    %v1078 = vadd.f32 %v1070, 1e-06
    %v1079 = vadd.f32 %v1077, 1e-06
    %v1080 = vrcp.pop %v1078
    %v1081 = vrcp.pop %v1079
    %v1083 = vlaneseq
    %v1084 = vshrl.u32 %v1083, 7
    %v1085 = vsub.s32 0, %v1084
    %v1086 = vrot.slane %v148, %v1085
    %v1088 = vmul.f32 %v1086, %v1052
    %v1089 = vmul.f32 %v1086, %v1053
    %v1090 = vmul.f32 %v1088, %v1080
    %v1091 = vmul.f32 %v1089, %v1081
    %v1093 = vlaneseq
    %v1094 = vshrl.u32 %v1093, 7
    %v1095 = vsub.s32 0, %v1094
    %v1096 = vrot.slane %v149, %v1095
    %v1098 = vadd.f32 %v1090, %v1096
    %v1099 = vadd.f32 %v1091, %v1096
    %v1100 = vld [vmem:[#allocation11] sm:$0xff]
    %v1101 = vld [vmem:[#allocation11 + $0x8] sm:$0xff]
    %v1102 = vld [vmem:[#allocation11 + $0x10] sm:$0xff]
    %v1103 = vld [vmem:[#allocation11 + $0x18] sm:$0xff]
    %v1105 = vlaneseq
    %v1106 = vshrl.u32 %v1105, 7
    %v1107 = vsub.s32 0, %v1106
    %v1108 = vrot.slane %v150, %v1107
    %v1111 = vsel %vm152, %v1098, 0
    %v1114 = vsel %vm152, %v1099, 0
    %1116 = vmatprep.subr.mxu0 0.0
    %1117 = vmatpush1.msra.mxu0 %v1100
    %1118 = vmatprep.subr.mxu0 0.0
    %1119 = vmatpush1.msra.mxu0 %v1101
    %1120 = vmatprep.subr.mxu0 0.0
    %1121 = vmatpush1.msra.mxu0 %v1102
    %1122 = vmatprep.subr.mxu0 0.0
    %1123 = vmatpush1.msra.mxu0 %v1103
    %1124 = vmatprep.subr.mxu0 0.0
    %1125 = vmatpush1.msra.mxu0 0.0
    %1126 = vmatprep.subr.mxu0 0.0
    %1127 = vmatpush1.msra.mxu0 0.0
    %1128 = vmatprep.subr.mxu0 0.0
    %1129 = vmatpush1.msra.mxu0 0.0
    %1130 = vmatprep.subr.mxu0 0.0
    %1131 = vmatpush1.msra.mxu0 0.0
    %1132 = vmatprep.subr.mxu0 0.0
    %1133 = vmatpush1.msra.mxu0 0.0
    %1134 = vmatprep.subr.mxu0 0.0
    %1135 = vmatpush1.msra.mxu0 0.0
    %1136 = vmatprep.subr.mxu0 0.0
    %1137 = vmatpush1.msra.mxu0 0.0
    %1138 = vmatprep.subr.mxu0 0.0
    %1139 = vmatpush1.msra.mxu0 0.0
    %1140 = vmatprep.subr.mxu0 0.0
    %1141 = vmatpush1.msra.mxu0 0.0
    %1142 = vmatprep.subr.mxu0 0.0
    %1143 = vmatpush1.msra.mxu0 0.0
    %1144 = vmatprep.subr.mxu0 0.0
    %1145 = vmatpush1.msra.mxu0 0.0
    %1146 = vmatprep.subr.mxu0 0.0
    %1147 = vmatpush1.msra.mxu0 0.0
    %1148 = vmatprep.subr.mxu0 0.0
    %1149 = vmatpush1.msra.mxu0 0.0
    %1150 = vmatprep.subr.mxu0 0.0
    %1151 = vmatpush1.msra.mxu0 0.0
    %1152 = vmatprep.subr.mxu0 0.0
    %1153 = vmatpush1.msra.mxu0 0.0
    %1154 = vmatprep.subr.mxu0 0.0
    %1155 = vmatpush1.msra.mxu0 0.0
    %1156 = vmatprep.subr.mxu0 0.0
    %1157 = vmatpush1.msra.mxu0 0.0
    %1158 = vmatprep.subr.mxu0 0.0
    %1159 = vmatpush1.msra.mxu0 0.0
    %1160 = vmatprep.subr.mxu0 0.0
    %1161 = vmatpush1.msra.mxu0 0.0
    %1162 = vmatprep.subr.mxu0 0.0
    %1163 = vmatpush1.msra.mxu0 0.0
    %1164 = vmatprep.subr.mxu0 0.0
    %1165 = vmatpush1.msra.mxu0 0.0
    %1166 = vmatprep.subr.mxu0 0.0
    %1167 = vmatpush1.msra.mxu0 0.0
    %1168 = vmatprep.subr.mxu0 0.0
    %1169 = vmatpush1.msra.mxu0 0.0
    %1170 = vmatprep.subr.mxu0 0.0
    %1171 = vmatpush1.msra.mxu0 0.0
    %1172 = vmatprep.subr.mxu0 0.0
    %1173 = vmatpush1.msra.mxu0 0.0
    %1174 = vmatprep.subr.mxu0 0.0
    %1175 = vmatpush1.msra.mxu0 0.0
    %1176 = vmatprep.subr.mxu0 0.0
    %1177 = vmatpush1.msra.mxu0 0.0
    %1178 = vmatprep.subr.mxu0 0.0
    %1179 = vmatpush1.msra.mxu0 0.0
    %1180 = vmatprep.mubr.f32.mxu0 0.0
    %1181 = vmatmul.mubr.f32.gmra.mrb[0].mxu0 %v1111
    %v1182 = vpop.f32.mrb[0].mxu0
    %v1183 = vadd.f32 %v1108, %v1182
    %v1184 = vpop.f32.mrb[0].mxu0
    %1185 = vmatprep.mubr.f32.mxu0 0.0
    %1186 = vmatmul.mubr.f32.gmra.mrb[0].mxu0 %v1114
    %v1187 = vpop.f32.mrb[0].mxu0
    %v1188 = vadd.f32 %v1108, %v1187
    %v1189 = vpop.f32.mrb[0].mxu0
    %1190 = vdwg.mxu0
    %v1191 = vmax.f32 %v1183, 0.0
    %v1192 = vmax.f32 %v1188, 0.0
    %v1193 = vld [vmem:[%s14] sm:$0xff]
    %v1194 = vld [vmem:[%s14 + $0x8] sm:$0xff]
    %v1195 = vld [vmem:[%s14 + $0x10] sm:$0xff]
    %v1196 = vld [vmem:[%s14 + $0x18] sm:$0xff]
    %v1197 = vld [vmem:[%s14 + $0x20] sm:$0xff]
    %v1198 = vld [vmem:[%s14 + $0x28] sm:$0xff]
    %v1199 = vld [vmem:[%s14 + $0x30] sm:$0xff]
    %v1200 = vld [vmem:[%s14 + $0x38] sm:$0xff]
    %v1202 = vlaneseq
    %v1203 = vshrl.u32 %v1202, 7
    %v1204 = vsub.s32 0, %v1203
    %v1205 = vrot.slane %v151, %v1204
    %vm1207 = vcmask 523264
    %v1209 = vsel %vm1207, %v1191, 0
    %v1212 = vsel %vm1207, %v1192, 0
    %1214 = vmatprep.subr.mxu0 0.0
    %1215 = vmatpush1.msra.mxu0 %v1193
    %1216 = vmatprep.subr.mxu0 0.0
    %1217 = vmatpush1.msra.mxu0 %v1194
    %1218 = vmatprep.subr.mxu0 0.0
    %1219 = vmatpush1.msra.mxu0 %v1195
    %1220 = vmatprep.subr.mxu0 0.0
    %1221 = vmatpush1.msra.mxu0 %v1196
    %1222 = vmatprep.subr.mxu0 0.0
    %1223 = vmatpush1.msra.mxu0 %v1197
    %1224 = vmatprep.subr.mxu0 0.0
    %1225 = vmatpush1.msra.mxu0 %v1198
    %1226 = vmatprep.subr.mxu0 0.0
    %1227 = vmatpush1.msra.mxu0 %v1199
    %1228 = vmatprep.subr.mxu0 0.0
    %1229 = vmatpush1.msra.mxu0 %v1200
    %1230 = vmatprep.subr.mxu0 0.0
    %1231 = vmatpush1.msra.mxu0 0.0
    %1232 = vmatprep.subr.mxu0 0.0
    %1233 = vmatpush1.msra.mxu0 0.0
    %1234 = vmatprep.subr.mxu0 0.0
    %1235 = vmatpush1.msra.mxu0 0.0
    %1236 = vmatprep.subr.mxu0 0.0
    %1237 = vmatpush1.msra.mxu0 0.0
    %1238 = vmatprep.subr.mxu0 0.0
    %1239 = vmatpush1.msra.mxu0 0.0
    %1240 = vmatprep.subr.mxu0 0.0
    %1241 = vmatpush1.msra.mxu0 0.0
    %1242 = vmatprep.subr.mxu0 0.0
    %1243 = vmatpush1.msra.mxu0 0.0
    %1244 = vmatprep.subr.mxu0 0.0
    %1245 = vmatpush1.msra.mxu0 0.0
    %1246 = vmatprep.subr.mxu0 0.0
    %1247 = vmatpush1.msra.mxu0 0.0
    %1248 = vmatprep.subr.mxu0 0.0
    %1249 = vmatpush1.msra.mxu0 0.0
    %1250 = vmatprep.subr.mxu0 0.0
    %1251 = vmatpush1.msra.mxu0 0.0
    %1252 = vmatprep.subr.mxu0 0.0
    %1253 = vmatpush1.msra.mxu0 0.0
    %1254 = vmatprep.subr.mxu0 0.0
    %1255 = vmatpush1.msra.mxu0 0.0
    %1256 = vmatprep.subr.mxu0 0.0
    %1257 = vmatpush1.msra.mxu0 0.0
    %1258 = vmatprep.subr.mxu0 0.0
    %1259 = vmatpush1.msra.mxu0 0.0
    %1260 = vmatprep.subr.mxu0 0.0
    %1261 = vmatpush1.msra.mxu0 0.0
    %1262 = vmatprep.subr.mxu0 0.0
    %1263 = vmatpush1.msra.mxu0 0.0
    %1264 = vmatprep.subr.mxu0 0.0
    %1265 = vmatpush1.msra.mxu0 0.0
    %1266 = vmatprep.subr.mxu0 0.0
    %1267 = vmatpush1.msra.mxu0 0.0
    %1268 = vmatprep.subr.mxu0 0.0
    %1269 = vmatpush1.msra.mxu0 0.0
    %1270 = vmatprep.subr.mxu0 0.0
    %1271 = vmatpush1.msra.mxu0 0.0
    %1272 = vmatprep.subr.mxu0 0.0
    %1273 = vmatpush1.msra.mxu0 0.0
    %1274 = vmatprep.subr.mxu0 0.0
    %1275 = vmatpush1.msra.mxu0 0.0
    %1276 = vmatprep.subr.mxu0 0.0
    %1277 = vmatpush1.msra.mxu0 0.0
    %1278 = vmatprep.mubr.f32.mxu0 0.0
    %1279 = vmatmul.mubr.f32.gmra.mrb[0].mxu0 %v1209
    %v1280 = vpop.f32.mrb[0].mxu0
    %v1281 = vadd.f32 %v1205, %v1280
    %v1282 = vpop.f32.mrb[0].mxu0
    %1283 = vmatprep.mubr.f32.mxu0 0.0
    %1284 = vmatmul.mubr.f32.gmra.mrb[0].mxu0 %v1212
    %v1285 = vpop.f32.mrb[0].mxu0
    %v1286 = vadd.f32 %v1205, %v1285
    %v1287 = vpop.f32.mrb[0].mxu0
    %1288 = vdwg.mxu0
    %v1289 = vadd.f32 %v1042, %v1281
    %v1290 = vadd.f32 %v1043, %v1286
    %1291 = vst.msk [vmem:[#allocation13] sm:$0xff] %vm152, %v1289
    %1292 = vst.msk [vmem:[#allocation13 + $0x8] sm:$0xff] %vm152, %v1290
    // Predicated region
    $region90: #{tpu_custom_call.1} parent=1 // pred_check
      _
    $region91: #{tpu_custom_call.1} parent=1 // pred_check_branch
      %1294 = sbr.rel (0) target = $region93
    $region92: #{tpu_custom_call.1} parent=1 // pred_region
      %s1296 = ssub.s32 256, 256
      %1297 = vsyncadd [#allocation4], %s1296
      %s1298 = sshll.u32 [#allocation13], 4
      %s1299 = int_to_ptr.vmem [resolvable:$true] %s1298
      %1304 = dma.vmem_to_hbm [thread:$0]  %s1299, 256, %s16, [#allocation4], 128, 128, 8
    $region93: #{tpu_custom_call.1} parent=1 // pred_fallthru
      _
    // Predicated region
    $region94: #{tpu_custom_call.1} parent=1 // pred_check
      _
    $region95: #{tpu_custom_call.1} parent=1 // pred_check_branch
      %1306 = sbr.rel (0) target = $region97
    $region96: #{tpu_custom_call.1} parent=1 // pred_region
      %1307 = dma.done [#allocation4], 256
    $region97: #{tpu_custom_call.1} parent=1 // pred_fallthru
      _
    %1308 = vsyncpa [#allocation3], 1
    %1309 = vsyncpa [#allocation6], 1
    %1310 = vsyncpa [#allocation9], 1
    %1311 = vsyncpa [#allocation12], 1
    %1312 = vsyncpa [#allocation4], 1

</llo_original>
